<compile_context>
chip_gen: v5e
topology: v5e:2x2
jax: 0.10.0
libtpu: 0.0.40
codegen_flags: <defaults>
</compile_context>

<pallas_src>
import functools
import math

import jax
import jax.numpy as jnp
from jax.experimental import pallas as pl
from jax.experimental.pallas import tpu as pltpu


_NEG_BIG = -1e30   # large finite "masked" score (avoids inf-inf NaN)


def _vmem_limit_bytes():
    """Generation-aware VMEM budget (v5e/v6e: 128 MiB physical, v7x: 64 MiB)."""
    default = 48 * 1024 * 1024
    try:
        info = pltpu.get_tpu_info()
        cap = getattr(info, "vmem_capacity_bytes", None)
        if not cap:
            return default
        return int(min(cap * 3 // 4, 110 * 1024 * 1024))
    except Exception:
        return default


def _tile(dim, preferred, granule):
    """Largest block <= `preferred` that divides `dim` and is a multiple of
    `granule`; falls back to the full dimension (always a legal block)."""
    if dim <= preferred:
        return dim
    t = (preferred // granule) * granule
    while t >= granule:
        if dim % t == 0:
            return t
        t -= granule
    return dim


# ---------------------------------------------------------------------------
# Tiled linear (matmul + bias) kernel
# ---------------------------------------------------------------------------
def _linear_kernel(x_ref, w_ref, b_ref, o_ref, acc_ref, *, compute_dtype):
    k = pl.program_id(2)

    @pl.when(k == 0)
    def _init():
        acc_ref[...] = jnp.zeros_like(acc_ref)

    acc_ref[...] += jnp.dot(
        x_ref[...].astype(compute_dtype),
        w_ref[...].astype(compute_dtype),
        preferred_element_type=jnp.float32,
    )

    # Bias add + output cast fused into the K-axis finalize (once per output tile).
    @pl.when(k == pl.num_programs(2) - 1)
    def _finalize():
        o_ref[...] = (acc_ref[...] + b_ref[...].astype(jnp.float32)).astype(o_ref.dtype)


def pallas_linear(x, w, b, *, compute_dtype=jnp.bfloat16, out_dtype=None,
                  bm=512, bn=512, bk=1024):
    """y = x @ w + b on an (M//tm, N//tn, K//tk) grid with an f32 accumulator."""
    M, K = x.shape
    K2, N = w.shape
    assert K == K2 and b.shape == (N,)
    out_dtype = out_dtype or x.dtype

    sub = 8 if (x.dtype == jnp.float32 and jnp.dtype(out_dtype) == jnp.float32) else 16
    tm = _tile(M, bm, sub)      # sublane-dim tile
    tn = _tile(N, bn, 128)      # lane-dim tiles are 128-granular (or the full dim)
    tk = _tile(K, bk, 128)
    grid = (M // tm, N // tn, K // tk)

    return pl.pallas_call(
        functools.partial(_linear_kernel, compute_dtype=compute_dtype),
        out_shape=jax.ShapeDtypeStruct((M, N), out_dtype),
        grid=grid,
        in_specs=[
            pl.BlockSpec((tm, tk), lambda i, j, k: (i, k)),
            pl.BlockSpec((tk, tn), lambda i, j, k: (k, j)),
            pl.BlockSpec((1, tn), lambda i, j, k: (0, j)),
        ],
        out_specs=pl.BlockSpec((tm, tn), lambda i, j, k: (i, j)),
        scratch_shapes=[pltpu.VMEM((tm, tn), jnp.float32)],
        compiler_params=pltpu.CompilerParams(
            dimension_semantics=("parallel", "parallel", "arbitrary"),
            vmem_limit_bytes=_vmem_limit_bytes(),
        ),
    )(x, w, b.reshape(1, N))


# ---------------------------------------------------------------------------
# Causal flash-attention kernel (heads packed on the lane axis, fused QKV input)
# ---------------------------------------------------------------------------
def _flash_attn_kernel(q_ref, k_ref, v_ref, o_ref, *, heads_per_group, head_dim):
    qi = pl.program_id(2)
    G, hd = heads_per_group, head_dim
    blk = q_ref.shape[0]

    q = q_ref[...]                                   # (blk, G*hd); no whole-slab cast

    # Within-tile causal mask; used only on the diagonal kv chunk.
    row = jax.lax.broadcasted_iota(jnp.int32, (blk, blk), 0)
    col = jax.lax.broadcasted_iota(jnp.int32, (blk, blk), 1)
    causal = col <= row

    def attend(ci, carry, masked):
        start = pl.multiple_of(ci * blk, blk)
        k_c = k_ref[pl.ds(start, blk), :]            # (blk, G*hd) slice of resident slab
        v_c = v_ref[pl.ds(start, blk), :]
        new = []
        for h in range(G):                           # tiny static unroll (G = 128/hd)
            sl = slice(h * hd, (h + 1) * hd)
            m_p, l_p, acc_p = carry[h]
            # q @ k^T contracting last dims directly (no transpose materialized).
            s = jax.lax.dot_general(
                q[:, sl], k_c[:, sl],
                dimension_numbers=(((1,), (1,)), ((), ())),
                preferred_element_type=jnp.float32)  # (blk, blk) f32
            if masked:
                s = jnp.where(causal, s, _NEG_BIG)
            m_n = jnp.maximum(m_p, jnp.max(s, axis=-1, keepdims=True))
            alpha = jnp.exp(m_p - m_n)
            p = jnp.exp(s - m_n)
            l_n = alpha * l_p + jnp.sum(p, axis=-1, keepdims=True)
            acc_n = alpha * acc_p + jnp.dot(p.astype(v_c.dtype), v_c[:, sl],
                                            preferred_element_type=jnp.float32)
            new.append((m_n, l_n, acc_n))
        return tuple(new)

    init = tuple((jnp.full((blk, 1), _NEG_BIG, jnp.float32),
                  jnp.zeros((blk, 1), jnp.float32),
                  jnp.zeros((blk, hd), jnp.float32)) for _ in range(G))

    # Strictly-lower (fully unmasked) kv chunks: dynamic trip count qi skips all
    # upper-triangle work.  Diagonal chunk (only one needing a mask) comes last,
    # so the output is complete and written in this same grid step.
    carry = jax.lax.fori_loop(0, qi, lambda ci, c: attend(ci, c, False), init)
    carry = attend(qi, carry, True)

    parts = [(acc / l).astype(o_ref.dtype) for (_, l, acc) in carry]
    o_ref[...] = parts[0] if G == 1 else jnp.concatenate(parts, axis=-1)


def _group_width(n_head, head_dim, C):
    if head_dim % 128 == 0:
        return head_dim                    # one head per group, already lane-aligned
    if 128 % head_dim == 0 and C % 128 == 0:
        return 128                         # pack 128 // head_dim heads per lane group
    return C                               # fallback: all heads in one group


def pallas_flash_attention(qkv, n_head, *, block=256):
    """Causal flash attention over fused (B, T, 3C) qkv activations -> (B, T, C)."""
    B, T, C3 = qkv.shape
    C = C3 // 3
    assert C3 == 3 * C and C % n_head == 0
    head_dim = C // n_head
    gw = _group_width(n_head, head_dim, C)
    heads_per_group = gw // head_dim
    n_groups = C // gw

    sub = 8 if qkv.dtype == jnp.float32 else 16
    blk = _tile(T, block, sub)
    grid = (B, n_groups, T // blk)          # (batch, head group, q tile)

    q_spec = pl.BlockSpec((None, blk, gw), lambda b, g, qi: (b, qi, g))
    # K/V index maps are independent of qi: the (T, gw) slab is DMA'd once per
    # (batch, head-group) and stays resident in VMEM across all q tiles.
    k_spec = pl.BlockSpec((None, T, gw), lambda b, g, qi: (b, 0, n_groups + g))
    v_spec = pl.BlockSpec((None, T, gw), lambda b, g, qi: (b, 0, 2 * n_groups + g))
    o_spec = pl.BlockSpec((None, blk, gw), lambda b, g, qi: (b, qi, g))

    return pl.pallas_call(
        functools.partial(_flash_attn_kernel,
                          heads_per_group=heads_per_group, head_dim=head_dim),
        out_shape=jax.ShapeDtypeStruct((B, T, C), qkv.dtype),
        grid=grid,
        in_specs=[q_spec, k_spec, v_spec],
        out_specs=o_spec,
        compiler_params=pltpu.CompilerParams(
            # batch / head-group are parallel (balanced megacore split even though
            # per-q-tile causal work is triangular); q tiles sequential so the
            # resident K/V slab is reused across consecutive steps.
            dimension_semantics=("parallel", "parallel", "arbitrary"),
            vmem_limit_bytes=_vmem_limit_bytes(),
        ),
    )(qkv, qkv, qkv)


# ---------------------------------------------------------------------------
# Rotary (head-index quirk) + softmax scale folded into the projection weights
# ---------------------------------------------------------------------------
def _head_rotary_sin_cos(n_head, head_dim):
    # Faithful to the reference: RotaryPositionEmbedding is invoked on
    # (B, n_head, T, hd) tensors, so its "position" index is the *head* index.
    inv_freq = 1.0 / (10000.0 ** (jnp.arange(0, head_dim, 2, dtype=jnp.float32) / head_dim))
    pos = jnp.arange(n_head, dtype=jnp.float32)
    freqs = pos[:, None] * inv_freq[None, :]
    emb = jnp.concatenate([freqs, freqs], axis=-1)            # (H, hd)
    return jnp.sin(emb), jnp.cos(emb)


def _rotary_matrices(sin, cos):
    """Per-head matrices R with (row-vector convention) x_rot = x @ R[h]."""
    n_head, head_dim = sin.shape
    half = head_dim // 2
    eye = jnp.eye(head_dim, dtype=jnp.float32)
    eye_h = jnp.eye(half, dtype=jnp.float32)
    zeros_h = jnp.zeros((half, half), dtype=jnp.float32)
    # s_mat[i, j] = coefficient of x[i] in rotate_half(x)[j]
    s_mat = jnp.block([[zeros_h, eye_h], [-eye_h, zeros_h]])
    return cos[:, None, :] * eye[None] + sin[:, None, :] * s_mat[None]   # (H, hd, hd)


# ---------------------------------------------------------------------------
# Full module forward
# ---------------------------------------------------------------------------
def causal_self_attention(x, w_attn, b_attn, w_proj, b_proj, n_head, *,
                          compute_dtype=jnp.bfloat16, attn_block=256):
    """Forward pass of the PyTorch CausalSelfAttention module.

    Weights are (in_features, out_features), i.e. the transpose of the torch
    nn.Linear.weight, so every projection is y = x @ W + b."""
    B, T, C = x.shape
    assert C % n_head == 0
    head_dim = C // n_head

    # Fold the per-head-constant rotary rotation and the 1/sqrt(hd) scale into
    # the q / k projection columns (mathematically exact for this module).
    hi = jax.lax.Precision.HIGHEST
    sin, cos = _head_rotary_sin_cos(n_head, head_dim)
    rot = _rotary_matrices(sin, cos)                                    # (H, hd, hd)
    scale = 1.0 / math.sqrt(head_dim)
    w3 = w_attn.reshape(C, 3, n_head, head_dim)
    b3 = b_attn.reshape(3, n_head, head_dim)
    wq = (jnp.einsum("chd,hde->che", w3[:, 0], rot, precision=hi) * scale).reshape(C, C)
    bq = (jnp.einsum("hd,hde->he", b3[0], rot, precision=hi) * scale).reshape(C)
    wk = jnp.einsum("chd,hde->che", w3[:, 1], rot, precision=hi).reshape(C, C)
    bk = jnp.einsum("hd,hde->he", b3[1], rot, precision=hi).reshape(C)
    w_qkv = jnp.concatenate([wq, wk, w3[:, 2].reshape(C, C)], axis=1)   # (C, 3C)
    b_qkv = jnp.concatenate([bq, bk, b3[2].reshape(C)])

    # One fused QKV projection; activations kept in bf16 (f32 accumulation) by
    # default to halve attention-side HBM traffic and hit the bf16 MXU rate.
    act_dtype = jnp.bfloat16 if compute_dtype == jnp.bfloat16 else x.dtype
    x2 = x.reshape(B * T, C)
    qkv = pallas_linear(x2, w_qkv, b_qkv, compute_dtype=compute_dtype,
                        out_dtype=act_dtype).reshape(B, T, 3 * C)

    # Causal flash attention straight on the fused (B, T, 3C) slab.
    y = pallas_flash_attention(qkv, n_head, block=attn_block)

    # Output projection back to the input dtype.
    out = pallas_linear(y.reshape(B * T, C), w_proj, b_proj,
                        compute_dtype=compute_dtype, out_dtype=x.dtype)
    return out.reshape(B, T, C)


# ---------------------------------------------------------------------------
# Pure-JAX reference (faithful port of the PyTorch forward, including the
# head-index rotary quirk), used only to verify the Pallas result.
# ---------------------------------------------------------------------------
def reference_forward(x, w_attn, b_attn, w_proj, b_proj, n_head):
    B, T, C = x.shape
    hd = C // n_head
    qkv = x @ w_attn + b_attn
    q, k, v = jnp.split(qkv, 3, axis=2)
    q = q.reshape(B, T, n_head, hd).transpose(0, 2, 1, 3)
    k = k.reshape(B, T, n_head, hd).transpose(0, 2, 1, 3)
    v = v.reshape(B, T, n_head, hd).transpose(0, 2, 1, 3)

    inv_freq = 1.0 / (10000.0 ** (jnp.arange(0, hd, 2, dtype=jnp.float32) / hd))
    pos = jnp.arange(n_head, dtype=jnp.float32)     # rotary "positions" = head index
    freqs = pos[:, None] * inv_freq[None, :]
    emb = jnp.concatenate([freqs, freqs], axis=-1)
    sin = jnp.sin(emb).reshape(1, n_head, 1, hd)
    cos = jnp.cos(emb).reshape(1, n_head, 1, hd)

    def rot_half(t):
        t1, t2 = jnp.split(t, 2, axis=-1)
        return jnp.concatenate([-t2, t1], axis=-1)

    q = q * cos + rot_half(q) * sin
    k = k * cos + rot_half(k) * sin

    scores = jnp.einsum("bhqd,bhkd->bhqk", q, k) / math.sqrt(hd)
    mask = jnp.tril(jnp.ones((T, T), dtype=bool))
    scores = jnp.where(mask, scores, -jnp.inf)
    p = jax.nn.softmax(scores, axis=-1)
    y = jnp.einsum("bhqk,bhkd->bhqd", p, v)
    y = y.transpose(0, 2, 1, 3).reshape(B, T, C)
    return y @ w_proj + b_proj


if __name__ == "__main__":
    B, T, C, n_head = 2, 128, 128, 4     # head_dim = 32, lane-aligned head groups

    key = jax.random.PRNGKey(0)
    k1, k2, k3, k4, k5, k6, k7, k8 = jax.random.split(key, 8)

    x = jax.random.normal(k1, (B, T, C), dtype=jnp.float32)
    # weights stored as (in_features, out_features) = transpose of torch Linear.weight
    w_attn = jax.random.normal(k2, (C, 3 * C), dtype=jnp.float32) * 0.02
    b_attn = jax.random.normal(k3, (3 * C,), dtype=jnp.float32) * 0.02
    w_proj = jax.random.normal(k4, (C, C), dtype=jnp.float32) * 0.02
    b_proj = jax.random.normal(k5, (C,), dtype=jnp.float32) * 0.02

    with jax.default_matmul_precision("highest"):
        ref = reference_forward(x, w_attn, b_attn, w_proj, b_proj, n_head)

    # f32 path with small attention tiles so the multi-q-tile causal path
    # (dynamic kv loop + diagonal-only masking) is exercised at toy sizes.
    out_f32 = causal_self_attention(x, w_attn, b_attn, w_proj, b_proj, n_head,
                                    compute_dtype=jnp.float32, attn_block=32)
    out_f32 = jax.block_until_ready(out_f32)
    assert out_f32.shape == (B, T, C)
    err_f32 = float(jnp.max(jnp.abs(out_f32 - ref)))
    assert err_f32 < 1e-2, f"f32 mismatch vs reference: {err_f32}"

    # Default bf16 MXU path (bf16 activations / operands, f32 accumulation).
    out_bf16 = causal_self_attention(x, w_attn, b_attn, w_proj, b_proj, n_head)
    out_bf16 = jax.block_until_ready(out_bf16)
    err_bf16 = float(jnp.max(jnp.abs(out_bf16 - ref)))
    assert err_bf16 < 5e-2, f"bf16 mismatch vs reference: {err_bf16}"

    # Directly exercise the multi-block M/N/K-tiled accumulation path of the linear.
    xt = jax.random.normal(k6, (32, 256), dtype=jnp.float32)
    wt = jax.random.normal(k7, (256, 384), dtype=jnp.float32) * 0.05
    bt = jax.random.normal(k8, (384,), dtype=jnp.float32) * 0.05
    yt = jax.block_until_ready(
        pallas_linear(xt, wt, bt, compute_dtype=jnp.float32, bm=8, bn=128, bk=128))
    assert jnp.allclose(yt, xt @ wt + bt, atol=1e-2, rtol=1e-2), "tiled linear mismatch"

    print("KERNEL_OK")
</pallas_src>

<mosaic_0001>
module attributes {stable_mosaic.version = 11 : i64} {
  func.func @_linear_kernel(%arg0: i32, %arg1: i32, %arg2: i32, %arg3: memref<256x128xf32, #tpu.memory_space<vmem>>, %arg4: memref<128x384xf32, #tpu.memory_space<vmem>>, %arg5: memref<1x384xf32, #tpu.memory_space<vmem>>, %arg6: memref<256x384xf32, #tpu.memory_space<vmem>>, %arg7: memref<256x384xf32, #tpu.memory_space<vmem>>) attributes {dimension_semantics = [#tpu.dimension_semantics<parallel>, #tpu.dimension_semantics<parallel>, #tpu.dimension_semantics<arbitrary>], iteration_bounds = array<i64: 1, 1, 1>, scalar_prefetch = 0 : i64, scratch_operands = 1 : i64, tpu.core_type = #tpu.core_type<tc>, window_params = [{transform_indices = @transform_0, window_bounds = array<i64: 256, 128>}, {transform_indices = @transform_1, window_bounds = array<i64: 128, 384>}, {transform_indices = @transform_2, window_bounds = array<i64: 1, 384>}, {transform_indices = @transform_3, window_bounds = array<i64: 256, 384>}]} {
    %c0_i32 = arith.constant 0 : i32
    %0 = arith.cmpi eq, %arg2, %c0_i32 : i32
    %1 = arith.extui %0 : i1 to i32
    %c0_i32_0 = arith.constant 0 : i32
    %2 = arith.cmpi ne, %1, %c0_i32_0 : i32
    scf.if %2 {
      %cst_10 = arith.constant 0.000000e+00 : f32
      %12 = vector.broadcast %cst_10 : f32 to vector<256x384xf32>
      %c0_11 = arith.constant 0 : index
      %c0_12 = arith.constant 0 : index
      %13 = vector.load %arg7[%c0_11, %c0_12] : memref<256x384xf32, #tpu.memory_space<vmem>>, vector<256x384xf32>
      tpu.vector_store %arg7[%c0_11, %c0_12], %12 {strides = array<i32>} : memref<256x384xf32, #tpu.memory_space<vmem>>, vector<256x384xf32>,
    } else {
    }
    %c0 = arith.constant 0 : index
    %c0_1 = arith.constant 0 : index
    %3 = vector.load %arg7[%c0, %c0_1] : memref<256x384xf32, #tpu.memory_space<vmem>>, vector<256x384xf32>
    %c0_2 = arith.constant 0 : index
    %c0_3 = arith.constant 0 : index
    %4 = vector.load %arg3[%c0_2, %c0_3] : memref<256x128xf32, #tpu.memory_space<vmem>>, vector<256x128xf32>
    %c0_4 = arith.constant 0 : index
    %c0_5 = arith.constant 0 : index
    %5 = vector.load %arg4[%c0_4, %c0_5] : memref<128x384xf32, #tpu.memory_space<vmem>>, vector<128x384xf32>
    %cst = arith.constant dense<0.000000e+00> : vector<256x384xf32>
    %6 = tpu.matmul %4, %5, %cst {dimension_numbers = #tpu.dot_dimension_numbers<[1], [0], [0], [1], [0, 0, 1, 1], [], []>} : vector<256x128xf32>, vector<128x384xf32>, vector<256x384xf32> -> vector<256x384xf32>
    %7 = arith.addf %3, %6 : vector<256x384xf32>
    %c0_6 = arith.constant 0 : index
    %c0_7 = arith.constant 0 : index
    %8 = vector.load %arg7[%c0_6, %c0_7] : memref<256x384xf32, #tpu.memory_space<vmem>>, vector<256x384xf32>
    tpu.vector_store %arg7[%c0_6, %c0_7], %7 {strides = array<i32>} : memref<256x384xf32, #tpu.memory_space<vmem>>, vector<256x384xf32>,
    %c0_i32_8 = arith.constant 0 : i32
    %9 = arith.cmpi eq, %arg2, %c0_i32_8 : i32
    %10 = arith.extui %9 : i1 to i32
    %c0_i32_9 = arith.constant 0 : i32
    %11 = arith.cmpi ne, %10, %c0_i32_9 : i32
    scf.if %11 {
      %c0_10 = arith.constant 0 : index
      %c0_11 = arith.constant 0 : index
      %12 = vector.load %arg7[%c0_10, %c0_11] : memref<256x384xf32, #tpu.memory_space<vmem>>, vector<256x384xf32>
      %c0_12 = arith.constant 0 : index
      %c0_13 = arith.constant 0 : index
      %13 = vector.load %arg5[%c0_12, %c0_13] : memref<1x384xf32, #tpu.memory_space<vmem>>, vector<1x384xf32>
      %14 = vector.broadcast %13 : vector<1x384xf32> to vector<256x384xf32>
      %15 = arith.addf %12, %14 : vector<256x384xf32>
      %c0_14 = arith.constant 0 : index
      %c0_15 = arith.constant 0 : index
      %16 = vector.load %arg6[%c0_14, %c0_15] : memref<256x384xf32, #tpu.memory_space<vmem>>, vector<256x384xf32>
      tpu.vector_store %arg6[%c0_14, %c0_15], %15 {strides = array<i32>} : memref<256x384xf32, #tpu.memory_space<vmem>>, vector<256x384xf32>,
    } else {
    }
    return
  }
  func.func @transform_0(%arg0: i32, %arg1: i32, %arg2: i32) -> (i32, i32) {
    %c0_i32 = arith.constant 0 : i32
    return %arg0, %arg2 : i32, i32
  }
  func.func @transform_1(%arg0: i32, %arg1: i32, %arg2: i32) -> (i32, i32) {
    %c0_i32 = arith.constant 0 : i32
    return %arg2, %arg1 : i32, i32
  }
  func.func @transform_2(%arg0: i32, %arg1: i32, %arg2: i32) -> (i32, i32) {
    %c0_i32 = arith.constant 0 : i32
    %c0_i32_0 = arith.constant 0 : i32
    return %c0_i32, %arg1 : i32, i32
  }
  func.func @transform_3(%arg0: i32, %arg1: i32, %arg2: i32) -> (i32, i32) {
    %c0_i32 = arith.constant 0 : i32
    return %arg0, %arg1 : i32, i32
  }
}

</mosaic_0001>

<llo_original>
// kernel: tpu_custom_call.1
$region0: #{tpu_custom_call.1}
  #allocation0 [shape = 'u32[]', space=smem, size = 0x4, offset = 0x4, fixed_abs, tag = 'smem constant byte address 0x4 - core index']
  #allocation1 [shape = 'u32[72,128]{1,0:T(1,128)}', space=vmem, size = 0x9000, scoped, tag = 'internal scratch']
  #allocation2 [shape = 'f32[256,384]{1,0:T(8,128)}', space=vmem, size = 0x60000, scoped, tag = 'scratch operand']
  %s0 = inlined_call_operand.hbm [shape: f32[256,128], index: 0, kind: input, shape index: {}]
  %s1 = inlined_call_operand.hbm [shape: f32[128,384], index: 1, kind: input, shape index: {}]
  %s2 = inlined_call_operand.hbm [shape: f32[1,384], index: 2, kind: input, shape index: {}]
  %s3 = inlined_call_operand.hbm [shape: f32[256,384], index: 3, kind: output, shape index: {}]
  %s4 = sld [smem:[#allocation0]]
  $region42: #{tpu_custom_call.1} parent=0
    _
  %s6 = ssub.s32 1, %s4
  %s7 = scalar_select 0, %s6, %s4
  $region1: #{tpu_custom_call.1} parent=0
    #allocation3 [shape = 'u8[131072]{0}', space=vmem, size = 0x20000, scoped, tag = 'input window, operand 0, single buffered']
    #allocation4 [shape = 's32[1]{0}', space=sflag, size = 0x4, scoped, tag = 'scoped memory for tpu_custom_call.1']
    #allocation5 [shape = 's32[1]{0}', space=sflag, size = 0x4, scoped, tag = 'scoped memory for tpu_custom_call.1']
    #allocation6 [shape = 'u8[196608]{0}', space=vmem, size = 0x30000, scoped, tag = 'input window, operand 1, single buffered']
    #allocation7 [shape = 's32[1]{0}', space=sflag, size = 0x4, scoped, tag = 'scoped memory for tpu_custom_call.1']
    #allocation8 [shape = 'u8[1536]{0}', space=vmem, size = 0x800, scoped, tag = 'input window, operand 2, single buffered']
    #allocation9 [shape = 'u8[393216]{0}', space=vmem, size = 0x60000, scoped, tag = 'output window, operand 0, single buffered']
    %8 = vsyncpa [#allocation4], 0
    %9 = vsyncpa [#allocation7], 0
    %10 = vsyncpa [#allocation5], 0
    // Predicated region
    $region2: #{tpu_custom_call.1} parent=1 // pred_check
      _
    $region3: #{tpu_custom_call.1} parent=1 // pred_check_branch
      %12 = sbr.rel (0) target = $region5
    $region4: #{tpu_custom_call.1} parent=1 // pred_region
      %14 = vsyncadd [#allocation4], 0
      %s15 = sshll.u32 %s0, 4
      %s16 = int_to_ptr.hbm [resolvable:$true] %s15
      %s17 = sshll.u32 [#allocation3], 4
      %s18 = int_to_ptr.vmem [resolvable:$true] %s17
      %23 = dma.hbm_to_vmem [thread:$0]  %s16, 4096, %s18, [#allocation4], 128, 128, 8
    $region5: #{tpu_custom_call.1} parent=1 // pred_fallthru
      _
    // Predicated region
    $region6: #{tpu_custom_call.1} parent=1 // pred_check
      _
    $region7: #{tpu_custom_call.1} parent=1 // pred_check_branch
      %25 = sbr.rel (0) target = $region9
    $region8: #{tpu_custom_call.1} parent=1 // pred_region
      %27 = vsyncadd [#allocation7], 0
      %s28 = sshll.u32 %s1, 4
      %s29 = int_to_ptr.hbm [resolvable:$true] %s28
      %s30 = sshll.u32 [#allocation6], 4
      %s31 = int_to_ptr.vmem [resolvable:$true] %s30
      %36 = dma.hbm_to_vmem [thread:$0]  %s29, 6144, %s31, [#allocation7], 384, 384, 24
    $region9: #{tpu_custom_call.1} parent=1 // pred_fallthru
      _
    // Predicated region
    $region10: #{tpu_custom_call.1} parent=1 // pred_check
      _
    $region11: #{tpu_custom_call.1} parent=1 // pred_check_branch
      %38 = sbr.rel (0) target = $region13
    $region12: #{tpu_custom_call.1} parent=1 // pred_region
      %40 = vsyncadd [#allocation7], 0
      %s42 = sshll.u32 %s2, 4
      %s43 = int_to_ptr.hbm [resolvable:$true] %s42
      %s44 = sshll.u32 [#allocation8], 4
      %s45 = int_to_ptr.vmem [resolvable:$true] %s44
      %47 = dma.hbm_to_vmem [thread:$0]  %s43, 48, %s45, [#allocation7]
    $region13: #{tpu_custom_call.1} parent=1 // pred_fallthru
      _
    // Predicated region
    $region14: #{tpu_custom_call.1} parent=1 // pred_check
      _
    $region15: #{tpu_custom_call.1} parent=1 // pred_check_branch
      %49 = sbr.rel (0) target = $region17
    $region16: #{tpu_custom_call.1} parent=1 // pred_region
      %51 = dma.done [#allocation4], 4096
    $region17: #{tpu_custom_call.1} parent=1 // pred_fallthru
      _
    // Predicated region
    $region18: #{tpu_custom_call.1} parent=1 // pred_check
      _
    $region19: #{tpu_custom_call.1} parent=1 // pred_check_branch
      %53 = sbr.rel (0) target = $region21
    $region20: #{tpu_custom_call.1} parent=1 // pred_region
      %55 = dma.done [#allocation7], 6144
    $region21: #{tpu_custom_call.1} parent=1 // pred_fallthru
      _
    // Predicated region
    $region22: #{tpu_custom_call.1} parent=1 // pred_check
      _
    $region23: #{tpu_custom_call.1} parent=1 // pred_check_branch
      %57 = sbr.rel (0) target = $region25
    $region24: #{tpu_custom_call.1} parent=1 // pred_region
      %59 = dma.done [#allocation7], 48
    $region25: #{tpu_custom_call.1} parent=1 // pred_fallthru
      _
    %p60 = scmp.eq.s32.totalorder 0, 0
    // Predicated region
    $region26: #{tpu_custom_call.1} parent=1 // pred_check
      %p61 = pneg %p60
    $region27: #{tpu_custom_call.1} parent=1 // pred_check_branch
      %63 = sbr.rel (%p61) target = $region29
    $region28: #{tpu_custom_call.1} parent=1 // pred_region
      %64 = vst [vmem:[#allocation2] sm:$0xff] 0.0
      %65 = vst [vmem:[#allocation2 + $0x8] sm:$0xff] 0.0
      %66 = vst [vmem:[#allocation2 + $0x10] sm:$0xff] 0.0
      %67 = vst [vmem:[#allocation2 + $0x18] sm:$0xff] 0.0
      %68 = vst [vmem:[#allocation2 + $0x20] sm:$0xff] 0.0
      %69 = vst [vmem:[#allocation2 + $0x28] sm:$0xff] 0.0
      %70 = vst [vmem:[#allocation2 + $0x30] sm:$0xff] 0.0
      %71 = vst [vmem:[#allocation2 + $0x38] sm:$0xff] 0.0
      %72 = vst [vmem:[#allocation2 + $0x40] sm:$0xff] 0.0
      %73 = vst [vmem:[#allocation2 + $0x48] sm:$0xff] 0.0
      %74 = vst [vmem:[#allocation2 + $0x50] sm:$0xff] 0.0
      %75 = vst [vmem:[#allocation2 + $0x58] sm:$0xff] 0.0
      %76 = vst [vmem:[#allocation2 + $0x60] sm:$0xff] 0.0
      %77 = vst [vmem:[#allocation2 + $0x68] sm:$0xff] 0.0
      %78 = vst [vmem:[#allocation2 + $0x70] sm:$0xff] 0.0
      %79 = vst [vmem:[#allocation2 + $0x78] sm:$0xff] 0.0
      %80 = vst [vmem:[#allocation2 + $0x80] sm:$0xff] 0.0
      %81 = vst [vmem:[#allocation2 + $0x88] sm:$0xff] 0.0
      %82 = vst [vmem:[#allocation2 + $0x90] sm:$0xff] 0.0
      %83 = vst [vmem:[#allocation2 + $0x98] sm:$0xff] 0.0
      %84 = vst [vmem:[#allocation2 + $0xa0] sm:$0xff] 0.0
      %85 = vst [vmem:[#allocation2 + $0xa8] sm:$0xff] 0.0
      %86 = vst [vmem:[#allocation2 + $0xb0] sm:$0xff] 0.0
      %87 = vst [vmem:[#allocation2 + $0xb8] sm:$0xff] 0.0
      %88 = vst [vmem:[#allocation2 + $0xc0] sm:$0xff] 0.0
      %89 = vst [vmem:[#allocation2 + $0xc8] sm:$0xff] 0.0
      %90 = vst [vmem:[#allocation2 + $0xd0] sm:$0xff] 0.0
      %91 = vst [vmem:[#allocation2 + $0xd8] sm:$0xff] 0.0
      %92 = vst [vmem:[#allocation2 + $0xe0] sm:$0xff] 0.0
      %93 = vst [vmem:[#allocation2 + $0xe8] sm:$0xff] 0.0
      %94 = vst [vmem:[#allocation2 + $0xf0] sm:$0xff] 0.0
      %95 = vst [vmem:[#allocation2 + $0xf8] sm:$0xff] 0.0
      %96 = vst [vmem:[#allocation2 + $0x100] sm:$0xff] 0.0
      %97 = vst [vmem:[#allocation2 + $0x108] sm:$0xff] 0.0
      %98 = vst [vmem:[#allocation2 + $0x110] sm:$0xff] 0.0
      %99 = vst [vmem:[#allocation2 + $0x118] sm:$0xff] 0.0
      %100 = vst [vmem:[#allocation2 + $0x120] sm:$0xff] 0.0
      %101 = vst [vmem:[#allocation2 + $0x128] sm:$0xff] 0.0
      %102 = vst [vmem:[#allocation2 + $0x130] sm:$0xff] 0.0
      %103 = vst [vmem:[#allocation2 + $0x138] sm:$0xff] 0.0
      %104 = vst [vmem:[#allocation2 + $0x140] sm:$0xff] 0.0
      %105 = vst [vmem:[#allocation2 + $0x148] sm:$0xff] 0.0
      %106 = vst [vmem:[#allocation2 + $0x150] sm:$0xff] 0.0
      %107 = vst [vmem:[#allocation2 + $0x158] sm:$0xff] 0.0
      %108 = vst [vmem:[#allocation2 + $0x160] sm:$0xff] 0.0
      %109 = vst [vmem:[#allocation2 + $0x168] sm:$0xff] 0.0
      %110 = vst [vmem:[#allocation2 + $0x170] sm:$0xff] 0.0
      %111 = vst [vmem:[#allocation2 + $0x178] sm:$0xff] 0.0
      %112 = vst [vmem:[#allocation2 + $0x180] sm:$0xff] 0.0
      %113 = vst [vmem:[#allocation2 + $0x188] sm:$0xff] 0.0
      %114 = vst [vmem:[#allocation2 + $0x190] sm:$0xff] 0.0
      %115 = vst [vmem:[#allocation2 + $0x198] sm:$0xff] 0.0
      %116 = vst [vmem:[#allocation2 + $0x1a0] sm:$0xff] 0.0
      %117 = vst [vmem:[#allocation2 + $0x1a8] sm:$0xff] 0.0
      %118 = vst [vmem:[#allocation2 + $0x1b0] sm:$0xff] 0.0
      %119 = vst [vmem:[#allocation2 + $0x1b8] sm:$0xff] 0.0
      %120 = vst [vmem:[#allocation2 + $0x1c0] sm:$0xff] 0.0
      %121 = vst [vmem:[#allocation2 + $0x1c8] sm:$0xff] 0.0
      %122 = vst [vmem:[#allocation2 + $0x1d0] sm:$0xff] 0.0
      %123 = vst [vmem:[#allocation2 + $0x1d8] sm:$0xff] 0.0
      %124 = vst [vmem:[#allocation2 + $0x1e0] sm:$0xff] 0.0
      %125 = vst [vmem:[#allocation2 + $0x1e8] sm:$0xff] 0.0
      %126 = vst [vmem:[#allocation2 + $0x1f0] sm:$0xff] 0.0
      %127 = vst [vmem:[#allocation2 + $0x1f8] sm:$0xff] 0.0
      %128 = vst [vmem:[#allocation2 + $0x200] sm:$0xff] 0.0
      %129 = vst [vmem:[#allocation2 + $0x208] sm:$0xff] 0.0
      %130 = vst [vmem:[#allocation2 + $0x210] sm:$0xff] 0.0
      %131 = vst [vmem:[#allocation2 + $0x218] sm:$0xff] 0.0
      %132 = vst [vmem:[#allocation2 + $0x220] sm:$0xff] 0.0
      %133 = vst [vmem:[#allocation2 + $0x228] sm:$0xff] 0.0
      %134 = vst [vmem:[#allocation2 + $0x230] sm:$0xff] 0.0
      %135 = vst [vmem:[#allocation2 + $0x238] sm:$0xff] 0.0
      %136 = vst [vmem:[#allocation2 + $0x240] sm:$0xff] 0.0
      %137 = vst [vmem:[#allocation2 + $0x248] sm:$0xff] 0.0
      %138 = vst [vmem:[#allocation2 + $0x250] sm:$0xff] 0.0
      %139 = vst [vmem:[#allocation2 + $0x258] sm:$0xff] 0.0
      %140 = vst [vmem:[#allocation2 + $0x260] sm:$0xff] 0.0
      %141 = vst [vmem:[#allocation2 + $0x268] sm:$0xff] 0.0
      %142 = vst [vmem:[#allocation2 + $0x270] sm:$0xff] 0.0
      %143 = vst [vmem:[#allocation2 + $0x278] sm:$0xff] 0.0
      %144 = vst [vmem:[#allocation2 + $0x280] sm:$0xff] 0.0
      %145 = vst [vmem:[#allocation2 + $0x288] sm:$0xff] 0.0
      %146 = vst [vmem:[#allocation2 + $0x290] sm:$0xff] 0.0
      %147 = vst [vmem:[#allocation2 + $0x298] sm:$0xff] 0.0
      %148 = vst [vmem:[#allocation2 + $0x2a0] sm:$0xff] 0.0
      %149 = vst [vmem:[#allocation2 + $0x2a8] sm:$0xff] 0.0
      %150 = vst [vmem:[#allocation2 + $0x2b0] sm:$0xff] 0.0
      %151 = vst [vmem:[#allocation2 + $0x2b8] sm:$0xff] 0.0
      %152 = vst [vmem:[#allocation2 + $0x2c0] sm:$0xff] 0.0
      %153 = vst [vmem:[#allocation2 + $0x2c8] sm:$0xff] 0.0
      %154 = vst [vmem:[#allocation2 + $0x2d0] sm:$0xff] 0.0
      %155 = vst [vmem:[#allocation2 + $0x2d8] sm:$0xff] 0.0
      %156 = vst [vmem:[#allocation2 + $0x2e0] sm:$0xff] 0.0
      %157 = vst [vmem:[#allocation2 + $0x2e8] sm:$0xff] 0.0
      %158 = vst [vmem:[#allocation2 + $0x2f0] sm:$0xff] 0.0
      %159 = vst [vmem:[#allocation2 + $0x2f8] sm:$0xff] 0.0
    $region29: #{tpu_custom_call.1} parent=1 // pred_fallthru
      _
    %v160 = vld [vmem:[#allocation2] sm:$0xff]
    %v161 = vld [vmem:[#allocation2 + $0x8] sm:$0xff]
    %v162 = vld [vmem:[#allocation2 + $0x10] sm:$0xff]
    %v163 = vld [vmem:[#allocation2 + $0x18] sm:$0xff]
    %v164 = vld [vmem:[#allocation2 + $0x20] sm:$0xff]
    %v165 = vld [vmem:[#allocation2 + $0x28] sm:$0xff]
    %v166 = vld [vmem:[#allocation2 + $0x30] sm:$0xff]
    %v167 = vld [vmem:[#allocation2 + $0x38] sm:$0xff]
    %v168 = vld [vmem:[#allocation2 + $0x40] sm:$0xff]
    %v169 = vld [vmem:[#allocation2 + $0x48] sm:$0xff]
    %v170 = vld [vmem:[#allocation2 + $0x50] sm:$0xff]
    %v171 = vld [vmem:[#allocation2 + $0x58] sm:$0xff]
    %v172 = vld [vmem:[#allocation2 + $0x60] sm:$0xff]
    %v173 = vld [vmem:[#allocation2 + $0x68] sm:$0xff]
    %v174 = vld [vmem:[#allocation2 + $0x70] sm:$0xff]
    %v175 = vld [vmem:[#allocation2 + $0x78] sm:$0xff]
    %v176 = vld [vmem:[#allocation2 + $0x80] sm:$0xff]
    %v177 = vld [vmem:[#allocation2 + $0x88] sm:$0xff]
    %v178 = vld [vmem:[#allocation2 + $0x90] sm:$0xff]
    %v179 = vld [vmem:[#allocation2 + $0x98] sm:$0xff]
    %v180 = vld [vmem:[#allocation2 + $0xa0] sm:$0xff]
    %v181 = vld [vmem:[#allocation2 + $0xa8] sm:$0xff]
    %v182 = vld [vmem:[#allocation2 + $0xb0] sm:$0xff]
    %v183 = vld [vmem:[#allocation2 + $0xb8] sm:$0xff]
    %v184 = vld [vmem:[#allocation2 + $0xc0] sm:$0xff]
    %v185 = vld [vmem:[#allocation2 + $0xc8] sm:$0xff]
    %v186 = vld [vmem:[#allocation2 + $0xd0] sm:$0xff]
    %v187 = vld [vmem:[#allocation2 + $0xd8] sm:$0xff]
    %v188 = vld [vmem:[#allocation2 + $0xe0] sm:$0xff]
    %v189 = vld [vmem:[#allocation2 + $0xe8] sm:$0xff]
    %v190 = vld [vmem:[#allocation2 + $0xf0] sm:$0xff]
    %v191 = vld [vmem:[#allocation2 + $0xf8] sm:$0xff]
    %v192 = vld [vmem:[#allocation2 + $0x100] sm:$0xff]
    %v193 = vld [vmem:[#allocation2 + $0x108] sm:$0xff]
    %v194 = vld [vmem:[#allocation2 + $0x110] sm:$0xff]
    %v195 = vld [vmem:[#allocation2 + $0x118] sm:$0xff]
    %v196 = vld [vmem:[#allocation2 + $0x120] sm:$0xff]
    %v197 = vld [vmem:[#allocation2 + $0x128] sm:$0xff]
    %v198 = vld [vmem:[#allocation2 + $0x130] sm:$0xff]
    %v199 = vld [vmem:[#allocation2 + $0x138] sm:$0xff]
    %v200 = vld [vmem:[#allocation2 + $0x140] sm:$0xff]
    %v201 = vld [vmem:[#allocation2 + $0x148] sm:$0xff]
    %v202 = vld [vmem:[#allocation2 + $0x150] sm:$0xff]
    %v203 = vld [vmem:[#allocation2 + $0x158] sm:$0xff]
    %v204 = vld [vmem:[#allocation2 + $0x160] sm:$0xff]
    %v205 = vld [vmem:[#allocation2 + $0x168] sm:$0xff]
    %v206 = vld [vmem:[#allocation2 + $0x170] sm:$0xff]
    %v207 = vld [vmem:[#allocation2 + $0x178] sm:$0xff]
    %v208 = vld [vmem:[#allocation2 + $0x180] sm:$0xff]
    %v209 = vld [vmem:[#allocation2 + $0x188] sm:$0xff]
    %v210 = vld [vmem:[#allocation2 + $0x190] sm:$0xff]
    %v211 = vld [vmem:[#allocation2 + $0x198] sm:$0xff]
    %v212 = vld [vmem:[#allocation2 + $0x1a0] sm:$0xff]
    %v213 = vld [vmem:[#allocation2 + $0x1a8] sm:$0xff]
    %v214 = vld [vmem:[#allocation2 + $0x1b0] sm:$0xff]
    %v215 = vld [vmem:[#allocation2 + $0x1b8] sm:$0xff]
    %v216 = vld [vmem:[#allocation2 + $0x1c0] sm:$0xff]
    %v217 = vld [vmem:[#allocation2 + $0x1c8] sm:$0xff]
    %v218 = vld [vmem:[#allocation2 + $0x1d0] sm:$0xff]
    %v219 = vld [vmem:[#allocation2 + $0x1d8] sm:$0xff]
    %v220 = vld [vmem:[#allocation2 + $0x1e0] sm:$0xff]
    %v221 = vld [vmem:[#allocation2 + $0x1e8] sm:$0xff]
    %v222 = vld [vmem:[#allocation2 + $0x1f0] sm:$0xff]
    %v223 = vld [vmem:[#allocation2 + $0x1f8] sm:$0xff]
    %v224 = vld [vmem:[#allocation2 + $0x200] sm:$0xff]
    %v225 = vld [vmem:[#allocation2 + $0x208] sm:$0xff]
    %v226 = vld [vmem:[#allocation2 + $0x210] sm:$0xff]
    %v227 = vld [vmem:[#allocation2 + $0x218] sm:$0xff]
    %v228 = vld [vmem:[#allocation2 + $0x220] sm:$0xff]
    %v229 = vld [vmem:[#allocation2 + $0x228] sm:$0xff]
    %v230 = vld [vmem:[#allocation2 + $0x230] sm:$0xff]
    %v231 = vld [vmem:[#allocation2 + $0x238] sm:$0xff]
    %v232 = vld [vmem:[#allocation2 + $0x240] sm:$0xff]
    %v233 = vld [vmem:[#allocation2 + $0x248] sm:$0xff]
    %v234 = vld [vmem:[#allocation2 + $0x250] sm:$0xff]
    %v235 = vld [vmem:[#allocation2 + $0x258] sm:$0xff]
    %v236 = vld [vmem:[#allocation2 + $0x260] sm:$0xff]
    %v237 = vld [vmem:[#allocation2 + $0x268] sm:$0xff]
    %v238 = vld [vmem:[#allocation2 + $0x270] sm:$0xff]
    %v239 = vld [vmem:[#allocation2 + $0x278] sm:$0xff]
    %v240 = vld [vmem:[#allocation2 + $0x280] sm:$0xff]
    %v241 = vld [vmem:[#allocation2 + $0x288] sm:$0xff]
    %v242 = vld [vmem:[#allocation2 + $0x290] sm:$0xff]
    %v243 = vld [vmem:[#allocation2 + $0x298] sm:$0xff]
    %v244 = vld [vmem:[#allocation2 + $0x2a0] sm:$0xff]
    %v245 = vld [vmem:[#allocation2 + $0x2a8] sm:$0xff]
    %v246 = vld [vmem:[#allocation2 + $0x2b0] sm:$0xff]
    %v247 = vld [vmem:[#allocation2 + $0x2b8] sm:$0xff]
    %v248 = vld [vmem:[#allocation2 + $0x2c0] sm:$0xff]
    %v249 = vld [vmem:[#allocation2 + $0x2c8] sm:$0xff]
    %v250 = vld [vmem:[#allocation2 + $0x2d0] sm:$0xff]
    %v251 = vld [vmem:[#allocation2 + $0x2d8] sm:$0xff]
    %v252 = vld [vmem:[#allocation2 + $0x2e0] sm:$0xff]
    %v253 = vld [vmem:[#allocation2 + $0x2e8] sm:$0xff]
    %v254 = vld [vmem:[#allocation2 + $0x2f0] sm:$0xff]
    %v255 = vld [vmem:[#allocation2 + $0x2f8] sm:$0xff]
    %v256 = vld [vmem:[#allocation3] sm:$0xff]
    %v257 = vld [vmem:[#allocation3 + $0x8] sm:$0xff]
    %v258 = vld [vmem:[#allocation3 + $0x10] sm:$0xff]
    %v259 = vld [vmem:[#allocation3 + $0x18] sm:$0xff]
    %v260 = vld [vmem:[#allocation3 + $0x20] sm:$0xff]
    %v261 = vld [vmem:[#allocation3 + $0x28] sm:$0xff]
    %v262 = vld [vmem:[#allocation3 + $0x30] sm:$0xff]
    %v263 = vld [vmem:[#allocation3 + $0x38] sm:$0xff]
    %v264 = vld [vmem:[#allocation3 + $0x40] sm:$0xff]
    %v265 = vld [vmem:[#allocation3 + $0x48] sm:$0xff]
    %v266 = vld [vmem:[#allocation3 + $0x50] sm:$0xff]
    %v267 = vld [vmem:[#allocation3 + $0x58] sm:$0xff]
    %v268 = vld [vmem:[#allocation3 + $0x60] sm:$0xff]
    %v269 = vld [vmem:[#allocation3 + $0x68] sm:$0xff]
    %v270 = vld [vmem:[#allocation3 + $0x70] sm:$0xff]
    %v271 = vld [vmem:[#allocation3 + $0x78] sm:$0xff]
    %v272 = vld [vmem:[#allocation3 + $0x80] sm:$0xff]
    %v273 = vld [vmem:[#allocation3 + $0x88] sm:$0xff]
    %v274 = vld [vmem:[#allocation3 + $0x90] sm:$0xff]
    %v275 = vld [vmem:[#allocation3 + $0x98] sm:$0xff]
    %v276 = vld [vmem:[#allocation3 + $0xa0] sm:$0xff]
    %v277 = vld [vmem:[#allocation3 + $0xa8] sm:$0xff]
    %v278 = vld [vmem:[#allocation3 + $0xb0] sm:$0xff]
    %v279 = vld [vmem:[#allocation3 + $0xb8] sm:$0xff]
    %v280 = vld [vmem:[#allocation3 + $0xc0] sm:$0xff]
    %v281 = vld [vmem:[#allocation3 + $0xc8] sm:$0xff]
    %v282 = vld [vmem:[#allocation3 + $0xd0] sm:$0xff]
    %v283 = vld [vmem:[#allocation3 + $0xd8] sm:$0xff]
    %v284 = vld [vmem:[#allocation3 + $0xe0] sm:$0xff]
    %v285 = vld [vmem:[#allocation3 + $0xe8] sm:$0xff]
    %v286 = vld [vmem:[#allocation3 + $0xf0] sm:$0xff]
    %v287 = vld [vmem:[#allocation3 + $0xf8] sm:$0xff]
    %v288 = vld [vmem:[#allocation6] sm:$0xff]
    %v289 = vld [vmem:[#allocation6 + $0x8] sm:$0xff]
    %v290 = vld [vmem:[#allocation6 + $0x10] sm:$0xff]
    %v291 = vld [vmem:[#allocation6 + $0x18] sm:$0xff]
    %v292 = vld [vmem:[#allocation6 + $0x20] sm:$0xff]
    %v293 = vld [vmem:[#allocation6 + $0x28] sm:$0xff]
    %v294 = vld [vmem:[#allocation6 + $0x30] sm:$0xff]
    %v295 = vld [vmem:[#allocation6 + $0x38] sm:$0xff]
    %v296 = vld [vmem:[#allocation6 + $0x40] sm:$0xff]
    %v297 = vld [vmem:[#allocation6 + $0x48] sm:$0xff]
    %v298 = vld [vmem:[#allocation6 + $0x50] sm:$0xff]
    %v299 = vld [vmem:[#allocation6 + $0x58] sm:$0xff]
    %v300 = vld [vmem:[#allocation6 + $0x60] sm:$0xff]
    %v301 = vld [vmem:[#allocation6 + $0x68] sm:$0xff]
    %v302 = vld [vmem:[#allocation6 + $0x70] sm:$0xff]
    %v303 = vld [vmem:[#allocation6 + $0x78] sm:$0xff]
    %v304 = vld [vmem:[#allocation6 + $0x80] sm:$0xff]
    %v305 = vld [vmem:[#allocation6 + $0x88] sm:$0xff]
    %v306 = vld [vmem:[#allocation6 + $0x90] sm:$0xff]
    %v307 = vld [vmem:[#allocation6 + $0x98] sm:$0xff]
    %v308 = vld [vmem:[#allocation6 + $0xa0] sm:$0xff]
    %v309 = vld [vmem:[#allocation6 + $0xa8] sm:$0xff]
    %v310 = vld [vmem:[#allocation6 + $0xb0] sm:$0xff]
    %v311 = vld [vmem:[#allocation6 + $0xb8] sm:$0xff]
    %v312 = vld [vmem:[#allocation6 + $0xc0] sm:$0xff]
    %v313 = vld [vmem:[#allocation6 + $0xc8] sm:$0xff]
    %v314 = vld [vmem:[#allocation6 + $0xd0] sm:$0xff]
    %v315 = vld [vmem:[#allocation6 + $0xd8] sm:$0xff]
    %v316 = vld [vmem:[#allocation6 + $0xe0] sm:$0xff]
    %v317 = vld [vmem:[#allocation6 + $0xe8] sm:$0xff]
    %v318 = vld [vmem:[#allocation6 + $0xf0] sm:$0xff]
    %v319 = vld [vmem:[#allocation6 + $0xf8] sm:$0xff]
    %v320 = vld [vmem:[#allocation6 + $0x100] sm:$0xff]
    %v321 = vld [vmem:[#allocation6 + $0x108] sm:$0xff]
    %v322 = vld [vmem:[#allocation6 + $0x110] sm:$0xff]
    %v323 = vld [vmem:[#allocation6 + $0x118] sm:$0xff]
    %v324 = vld [vmem:[#allocation6 + $0x120] sm:$0xff]
    %v325 = vld [vmem:[#allocation6 + $0x128] sm:$0xff]
    %v326 = vld [vmem:[#allocation6 + $0x130] sm:$0xff]
    %v327 = vld [vmem:[#allocation6 + $0x138] sm:$0xff]
    %v328 = vld [vmem:[#allocation6 + $0x140] sm:$0xff]
    %v329 = vld [vmem:[#allocation6 + $0x148] sm:$0xff]
    %v330 = vld [vmem:[#allocation6 + $0x150] sm:$0xff]
    %v331 = vld [vmem:[#allocation6 + $0x158] sm:$0xff]
    %v332 = vld [vmem:[#allocation6 + $0x160] sm:$0xff]
    %v333 = vld [vmem:[#allocation6 + $0x168] sm:$0xff]
    %v334 = vld [vmem:[#allocation6 + $0x170] sm:$0xff]
    %v335 = vld [vmem:[#allocation6 + $0x178] sm:$0xff]
    %336 = vmatpush.msra.mxu0 %v333
    %337 = vmatpush.msra.mxu0 %v330
    %338 = vmatpush.msra.mxu0 %v327
    %339 = vmatpush.msra.mxu0 %v324
    %340 = vmatpush.msra.mxu0 %v321
    %341 = vmatpush.msra.mxu0 %v318
    %342 = vmatpush.msra.mxu0 %v315
    %343 = vmatpush.msra.mxu0 %v312
    %344 = vmatpush.msra.mxu0 %v309
    %345 = vmatpush.msra.mxu0 %v306
    %346 = vmatpush.msra.mxu0 %v303
    %347 = vmatpush.msra.mxu0 %v300
    %348 = vmatpush.msra.mxu0 %v297
    %349 = vmatpush.msra.mxu0 %v294
    %350 = vmatpush.msra.mxu0 %v291
    %351 = vmatpush.msra.mxu0 %v288
    %352 = vmatmul.f32.gmra.mxu0 %v256
    %v353 = vpop.f32.mrf.mxu0
    %v354 = vadd.f32 0.0, %v353
    %355 = vmatmul.f32.gmra.mxu0 %v257
    %v356 = vpop.f32.mrf.mxu0
    %v357 = vadd.f32 0.0, %v356
    %358 = vmatmul.f32.gmra.mxu0 %v258
    %v359 = vpop.f32.mrf.mxu0
    %v360 = vadd.f32 0.0, %v359
    %361 = vmatmul.f32.gmra.mxu0 %v259
    %v362 = vpop.f32.mrf.mxu0
    %v363 = vadd.f32 0.0, %v362
    %364 = vmatmul.f32.gmra.mxu0 %v260
    %v365 = vpop.f32.mrf.mxu0
    %v366 = vadd.f32 0.0, %v365
    %367 = vmatmul.f32.gmra.mxu0 %v261
    %v368 = vpop.f32.mrf.mxu0
    %v369 = vadd.f32 0.0, %v368
    %370 = vmatmul.f32.gmra.mxu0 %v262
    %v371 = vpop.f32.mrf.mxu0
    %v372 = vadd.f32 0.0, %v371
    %373 = vmatmul.f32.gmra.mxu0 %v263
    %v374 = vpop.f32.mrf.mxu0
    %v375 = vadd.f32 0.0, %v374
    %376 = vmatmul.f32.gmra.mxu0 %v264
    %v377 = vpop.f32.mrf.mxu0
    %v378 = vadd.f32 0.0, %v377
    %379 = vmatmul.f32.gmra.mxu0 %v265
    %v380 = vpop.f32.mrf.mxu0
    %v381 = vadd.f32 0.0, %v380
    %382 = vmatmul.f32.gmra.mxu0 %v266
    %v383 = vpop.f32.mrf.mxu0
    %v384 = vadd.f32 0.0, %v383
    %385 = vmatmul.f32.gmra.mxu0 %v267
    %v386 = vpop.f32.mrf.mxu0
    %v387 = vadd.f32 0.0, %v386
    %388 = vmatmul.f32.gmra.mxu0 %v268
    %v389 = vpop.f32.mrf.mxu0
    %v390 = vadd.f32 0.0, %v389
    %391 = vmatmul.f32.gmra.mxu0 %v269
    %v392 = vpop.f32.mrf.mxu0
    %v393 = vadd.f32 0.0, %v392
    %394 = vmatmul.f32.gmra.mxu0 %v270
    %v395 = vpop.f32.mrf.mxu0
    %v396 = vadd.f32 0.0, %v395
    %397 = vmatmul.f32.gmra.mxu0 %v271
    %v398 = vpop.f32.mrf.mxu0
    %v399 = vadd.f32 0.0, %v398
    %400 = vmatmul.f32.gmra.mxu0 %v272
    %v401 = vpop.f32.mrf.mxu0
    %v402 = vadd.f32 0.0, %v401
    %403 = vmatmul.f32.gmra.mxu0 %v273
    %v404 = vpop.f32.mrf.mxu0
    %v405 = vadd.f32 0.0, %v404
    %406 = vmatmul.f32.gmra.mxu0 %v274
    %v407 = vpop.f32.mrf.mxu0
    %v408 = vadd.f32 0.0, %v407
    %409 = vmatmul.f32.gmra.mxu0 %v275
    %v410 = vpop.f32.mrf.mxu0
    %v411 = vadd.f32 0.0, %v410
    %412 = vmatmul.f32.gmra.mxu0 %v276
    %v413 = vpop.f32.mrf.mxu0
    %v414 = vadd.f32 0.0, %v413
    %415 = vmatmul.f32.gmra.mxu0 %v277
    %v416 = vpop.f32.mrf.mxu0
    %v417 = vadd.f32 0.0, %v416
    %418 = vmatmul.f32.gmra.mxu0 %v278
    %v419 = vpop.f32.mrf.mxu0
    %v420 = vadd.f32 0.0, %v419
    %421 = vmatmul.f32.gmra.mxu0 %v279
    %v422 = vpop.f32.mrf.mxu0
    %v423 = vadd.f32 0.0, %v422
    %424 = vmatmul.f32.gmra.mxu0 %v280
    %v425 = vpop.f32.mrf.mxu0
    %v426 = vadd.f32 0.0, %v425
    %427 = vmatmul.f32.gmra.mxu0 %v281
    %v428 = vpop.f32.mrf.mxu0
    %v429 = vadd.f32 0.0, %v428
    %430 = vmatmul.f32.gmra.mxu0 %v282
    %v431 = vpop.f32.mrf.mxu0
    %v432 = vadd.f32 0.0, %v431
    %433 = vmatmul.f32.gmra.mxu0 %v283
    %v434 = vpop.f32.mrf.mxu0
    %v435 = vadd.f32 0.0, %v434
    %436 = vmatmul.f32.gmra.mxu0 %v284
    %v437 = vpop.f32.mrf.mxu0
    %v438 = vadd.f32 0.0, %v437
    %439 = vmatmul.f32.gmra.mxu0 %v285
    %v440 = vpop.f32.mrf.mxu0
    %v441 = vadd.f32 0.0, %v440
    %442 = vmatmul.f32.gmra.mxu0 %v286
    %v443 = vpop.f32.mrf.mxu0
    %v444 = vadd.f32 0.0, %v443
    %445 = vmatmul.f32.gmra.mxu0 %v287
    %v446 = vpop.f32.mrf.mxu0
    %v447 = vadd.f32 0.0, %v446
    %448 = vdwg.mxu0
    %449 = vmatpush.msra.mxu0 %v334
    %450 = vmatpush.msra.mxu0 %v331
    %451 = vmatpush.msra.mxu0 %v328
    %452 = vmatpush.msra.mxu0 %v325
    %453 = vmatpush.msra.mxu0 %v322
    %454 = vmatpush.msra.mxu0 %v319
    %455 = vmatpush.msra.mxu0 %v316
    %456 = vmatpush.msra.mxu0 %v313
    %457 = vmatpush.msra.mxu0 %v310
    %458 = vmatpush.msra.mxu0 %v307
    %459 = vmatpush.msra.mxu0 %v304
    %460 = vmatpush.msra.mxu0 %v301
    %461 = vmatpush.msra.mxu0 %v298
    %462 = vmatpush.msra.mxu0 %v295
    %463 = vmatpush.msra.mxu0 %v292
    %464 = vmatpush.msra.mxu0 %v289
    %465 = vmatmul.f32.gmra.mxu0 %v256
    %v466 = vpop.f32.mrf.mxu0
    %v467 = vadd.f32 0.0, %v466
    %468 = vmatmul.f32.gmra.mxu0 %v257
    %v469 = vpop.f32.mrf.mxu0
    %v470 = vadd.f32 0.0, %v469
    %471 = vmatmul.f32.gmra.mxu0 %v258
    %v472 = vpop.f32.mrf.mxu0
    %v473 = vadd.f32 0.0, %v472
    %474 = vmatmul.f32.gmra.mxu0 %v259
    %v475 = vpop.f32.mrf.mxu0
    %v476 = vadd.f32 0.0, %v475
    %477 = vmatmul.f32.gmra.mxu0 %v260
    %v478 = vpop.f32.mrf.mxu0
    %v479 = vadd.f32 0.0, %v478
    %480 = vmatmul.f32.gmra.mxu0 %v261
    %v481 = vpop.f32.mrf.mxu0
    %v482 = vadd.f32 0.0, %v481
    %483 = vmatmul.f32.gmra.mxu0 %v262
    %v484 = vpop.f32.mrf.mxu0
    %v485 = vadd.f32 0.0, %v484
    %486 = vmatmul.f32.gmra.mxu0 %v263
    %v487 = vpop.f32.mrf.mxu0
    %v488 = vadd.f32 0.0, %v487
    %489 = vmatmul.f32.gmra.mxu0 %v264
    %v490 = vpop.f32.mrf.mxu0
    %v491 = vadd.f32 0.0, %v490
    %492 = vmatmul.f32.gmra.mxu0 %v265
    %v493 = vpop.f32.mrf.mxu0
    %v494 = vadd.f32 0.0, %v493
    %495 = vmatmul.f32.gmra.mxu0 %v266
    %v496 = vpop.f32.mrf.mxu0
    %v497 = vadd.f32 0.0, %v496
    %498 = vmatmul.f32.gmra.mxu0 %v267
    %v499 = vpop.f32.mrf.mxu0
    %v500 = vadd.f32 0.0, %v499
    %501 = vmatmul.f32.gmra.mxu0 %v268
    %v502 = vpop.f32.mrf.mxu0
    %v503 = vadd.f32 0.0, %v502
    %504 = vmatmul.f32.gmra.mxu0 %v269
    %v505 = vpop.f32.mrf.mxu0
    %v506 = vadd.f32 0.0, %v505
    %507 = vmatmul.f32.gmra.mxu0 %v270
    %v508 = vpop.f32.mrf.mxu0
    %v509 = vadd.f32 0.0, %v508
    %510 = vmatmul.f32.gmra.mxu0 %v271
    %v511 = vpop.f32.mrf.mxu0
    %v512 = vadd.f32 0.0, %v511
    %513 = vmatmul.f32.gmra.mxu0 %v272
    %v514 = vpop.f32.mrf.mxu0
    %v515 = vadd.f32 0.0, %v514
    %516 = vmatmul.f32.gmra.mxu0 %v273
    %v517 = vpop.f32.mrf.mxu0
    %v518 = vadd.f32 0.0, %v517
    %519 = vmatmul.f32.gmra.mxu0 %v274
    %v520 = vpop.f32.mrf.mxu0
    %v521 = vadd.f32 0.0, %v520
    %522 = vmatmul.f32.gmra.mxu0 %v275
    %v523 = vpop.f32.mrf.mxu0
    %v524 = vadd.f32 0.0, %v523
    %525 = vmatmul.f32.gmra.mxu0 %v276
    %v526 = vpop.f32.mrf.mxu0
    %v527 = vadd.f32 0.0, %v526
    %528 = vmatmul.f32.gmra.mxu0 %v277
    %v529 = vpop.f32.mrf.mxu0
    %v530 = vadd.f32 0.0, %v529
    %531 = vmatmul.f32.gmra.mxu0 %v278
    %v532 = vpop.f32.mrf.mxu0
    %v533 = vadd.f32 0.0, %v532
    %534 = vmatmul.f32.gmra.mxu0 %v279
    %v535 = vpop.f32.mrf.mxu0
    %v536 = vadd.f32 0.0, %v535
    %537 = vmatmul.f32.gmra.mxu0 %v280
    %v538 = vpop.f32.mrf.mxu0
    %v539 = vadd.f32 0.0, %v538
    %540 = vmatmul.f32.gmra.mxu0 %v281
    %v541 = vpop.f32.mrf.mxu0
    %v542 = vadd.f32 0.0, %v541
    %543 = vmatmul.f32.gmra.mxu0 %v282
    %v544 = vpop.f32.mrf.mxu0
    %v545 = vadd.f32 0.0, %v544
    %546 = vmatmul.f32.gmra.mxu0 %v283
    %v547 = vpop.f32.mrf.mxu0
    %v548 = vadd.f32 0.0, %v547
    %549 = vmatmul.f32.gmra.mxu0 %v284
    %v550 = vpop.f32.mrf.mxu0
    %v551 = vadd.f32 0.0, %v550
    %552 = vmatmul.f32.gmra.mxu0 %v285
    %v553 = vpop.f32.mrf.mxu0
    %v554 = vadd.f32 0.0, %v553
    %555 = vmatmul.f32.gmra.mxu0 %v286
    %v556 = vpop.f32.mrf.mxu0
    %v557 = vadd.f32 0.0, %v556
    %558 = vmatmul.f32.gmra.mxu0 %v287
    %v559 = vpop.f32.mrf.mxu0
    %v560 = vadd.f32 0.0, %v559
    %561 = vdwg.mxu0
    %562 = vmatpush.msra.mxu0 %v335
    %563 = vmatpush.msra.mxu0 %v332
    %564 = vmatpush.msra.mxu0 %v329
    %565 = vmatpush.msra.mxu0 %v326
    %566 = vmatpush.msra.mxu0 %v323
    %567 = vmatpush.msra.mxu0 %v320
    %568 = vmatpush.msra.mxu0 %v317
    %569 = vmatpush.msra.mxu0 %v314
    %570 = vmatpush.msra.mxu0 %v311
    %571 = vmatpush.msra.mxu0 %v308
    %572 = vmatpush.msra.mxu0 %v305
    %573 = vmatpush.msra.mxu0 %v302
    %574 = vmatpush.msra.mxu0 %v299
    %575 = vmatpush.msra.mxu0 %v296
    %576 = vmatpush.msra.mxu0 %v293
    %577 = vmatpush.msra.mxu0 %v290
    %578 = vmatmul.f32.gmra.mxu0 %v256
    %v579 = vpop.f32.mrf.mxu0
    %v580 = vadd.f32 0.0, %v579
    %581 = vmatmul.f32.gmra.mxu0 %v257
    %v582 = vpop.f32.mrf.mxu0
    %v583 = vadd.f32 0.0, %v582
    %584 = vmatmul.f32.gmra.mxu0 %v258
    %v585 = vpop.f32.mrf.mxu0
    %v586 = vadd.f32 0.0, %v585
    %587 = vmatmul.f32.gmra.mxu0 %v259
    %v588 = vpop.f32.mrf.mxu0
    %v589 = vadd.f32 0.0, %v588
    %590 = vmatmul.f32.gmra.mxu0 %v260
    %v591 = vpop.f32.mrf.mxu0
    %v592 = vadd.f32 0.0, %v591
    %593 = vmatmul.f32.gmra.mxu0 %v261
    %v594 = vpop.f32.mrf.mxu0
    %v595 = vadd.f32 0.0, %v594
    %596 = vmatmul.f32.gmra.mxu0 %v262
    %v597 = vpop.f32.mrf.mxu0
    %v598 = vadd.f32 0.0, %v597
    %599 = vmatmul.f32.gmra.mxu0 %v263
    %v600 = vpop.f32.mrf.mxu0
    %v601 = vadd.f32 0.0, %v600
    %602 = vmatmul.f32.gmra.mxu0 %v264
    %v603 = vpop.f32.mrf.mxu0
    %v604 = vadd.f32 0.0, %v603
    %605 = vmatmul.f32.gmra.mxu0 %v265
    %v606 = vpop.f32.mrf.mxu0
    %v607 = vadd.f32 0.0, %v606
    %608 = vmatmul.f32.gmra.mxu0 %v266
    %v609 = vpop.f32.mrf.mxu0
    %v610 = vadd.f32 0.0, %v609
    %611 = vmatmul.f32.gmra.mxu0 %v267
    %v612 = vpop.f32.mrf.mxu0
    %v613 = vadd.f32 0.0, %v612
    %614 = vmatmul.f32.gmra.mxu0 %v268
    %v615 = vpop.f32.mrf.mxu0
    %v616 = vadd.f32 0.0, %v615
    %617 = vmatmul.f32.gmra.mxu0 %v269
    %v618 = vpop.f32.mrf.mxu0
    %v619 = vadd.f32 0.0, %v618
    %620 = vmatmul.f32.gmra.mxu0 %v270
    %v621 = vpop.f32.mrf.mxu0
    %v622 = vadd.f32 0.0, %v621
    %623 = vmatmul.f32.gmra.mxu0 %v271
    %v624 = vpop.f32.mrf.mxu0
    %v625 = vadd.f32 0.0, %v624
    %626 = vmatmul.f32.gmra.mxu0 %v272
    %v627 = vpop.f32.mrf.mxu0
    %v628 = vadd.f32 0.0, %v627
    %629 = vmatmul.f32.gmra.mxu0 %v273
    %v630 = vpop.f32.mrf.mxu0
    %v631 = vadd.f32 0.0, %v630
    %632 = vmatmul.f32.gmra.mxu0 %v274
    %v633 = vpop.f32.mrf.mxu0
    %v634 = vadd.f32 0.0, %v633
    %635 = vmatmul.f32.gmra.mxu0 %v275
    %v636 = vpop.f32.mrf.mxu0
    %v637 = vadd.f32 0.0, %v636
    %638 = vmatmul.f32.gmra.mxu0 %v276
    %v639 = vpop.f32.mrf.mxu0
    %v640 = vadd.f32 0.0, %v639
    %641 = vmatmul.f32.gmra.mxu0 %v277
    %v642 = vpop.f32.mrf.mxu0
    %v643 = vadd.f32 0.0, %v642
    %644 = vmatmul.f32.gmra.mxu0 %v278
    %v645 = vpop.f32.mrf.mxu0
    %v646 = vadd.f32 0.0, %v645
    %647 = vmatmul.f32.gmra.mxu0 %v279
    %v648 = vpop.f32.mrf.mxu0
    %v649 = vadd.f32 0.0, %v648
    %650 = vmatmul.f32.gmra.mxu0 %v280
    %v651 = vpop.f32.mrf.mxu0
    %v652 = vadd.f32 0.0, %v651
    %653 = vmatmul.f32.gmra.mxu0 %v281
    %v654 = vpop.f32.mrf.mxu0
    %v655 = vadd.f32 0.0, %v654
    %656 = vmatmul.f32.gmra.mxu0 %v282
    %v657 = vpop.f32.mrf.mxu0
    %v658 = vadd.f32 0.0, %v657
    %659 = vmatmul.f32.gmra.mxu0 %v283
    %v660 = vpop.f32.mrf.mxu0
    %v661 = vadd.f32 0.0, %v660
    %662 = vmatmul.f32.gmra.mxu0 %v284
    %v663 = vpop.f32.mrf.mxu0
    %v664 = vadd.f32 0.0, %v663
    %665 = vmatmul.f32.gmra.mxu0 %v285
    %v666 = vpop.f32.mrf.mxu0
    %v667 = vadd.f32 0.0, %v666
    %668 = vmatmul.f32.gmra.mxu0 %v286
    %v669 = vpop.f32.mrf.mxu0
    %v670 = vadd.f32 0.0, %v669
    %671 = vmatmul.f32.gmra.mxu0 %v287
    %v672 = vpop.f32.mrf.mxu0
    %v673 = vadd.f32 0.0, %v672
    %674 = vdwg.mxu0
    %v675 = vadd.f32 %v160, %v354
    %v676 = vadd.f32 %v161, %v467
    %v677 = vadd.f32 %v162, %v580
    %v678 = vadd.f32 %v163, %v357
    %v679 = vadd.f32 %v164, %v470
    %v680 = vadd.f32 %v165, %v583
    %v681 = vadd.f32 %v166, %v360
    %v682 = vadd.f32 %v167, %v473
    %v683 = vadd.f32 %v168, %v586
    %v684 = vadd.f32 %v169, %v363
    %v685 = vadd.f32 %v170, %v476
    %v686 = vadd.f32 %v171, %v589
    %v687 = vadd.f32 %v172, %v366
    %v688 = vadd.f32 %v173, %v479
    %v689 = vadd.f32 %v174, %v592
    %v690 = vadd.f32 %v175, %v369
    %v691 = vadd.f32 %v176, %v482
    %v692 = vadd.f32 %v177, %v595
    %v693 = vadd.f32 %v178, %v372
    %v694 = vadd.f32 %v179, %v485
    %v695 = vadd.f32 %v180, %v598
    %v696 = vadd.f32 %v181, %v375
    %v697 = vadd.f32 %v182, %v488
    %v698 = vadd.f32 %v183, %v601
    %v699 = vadd.f32 %v184, %v378
    %v700 = vadd.f32 %v185, %v491
    %v701 = vadd.f32 %v186, %v604
    %v702 = vadd.f32 %v187, %v381
    %v703 = vadd.f32 %v188, %v494
    %v704 = vadd.f32 %v189, %v607
    %v705 = vadd.f32 %v190, %v384
    %v706 = vadd.f32 %v191, %v497
    %v707 = vadd.f32 %v192, %v610
    %v708 = vadd.f32 %v193, %v387
    %v709 = vadd.f32 %v194, %v500
    %v710 = vadd.f32 %v195, %v613
    %v711 = vadd.f32 %v196, %v390
    %v712 = vadd.f32 %v197, %v503
    %v713 = vadd.f32 %v198, %v616
    %v714 = vadd.f32 %v199, %v393
    %v715 = vadd.f32 %v200, %v506
    %v716 = vadd.f32 %v201, %v619
    %v717 = vadd.f32 %v202, %v396
    %v718 = vadd.f32 %v203, %v509
    %v719 = vadd.f32 %v204, %v622
    %v720 = vadd.f32 %v205, %v399
    %v721 = vadd.f32 %v206, %v512
    %v722 = vadd.f32 %v207, %v625
    %v723 = vadd.f32 %v208, %v402
    %v724 = vadd.f32 %v209, %v515
    %v725 = vadd.f32 %v210, %v628
    %v726 = vadd.f32 %v211, %v405
    %v727 = vadd.f32 %v212, %v518
    %v728 = vadd.f32 %v213, %v631
    %v729 = vadd.f32 %v214, %v408
    %v730 = vadd.f32 %v215, %v521
    %v731 = vadd.f32 %v216, %v634
    %v732 = vadd.f32 %v217, %v411
    %v733 = vadd.f32 %v218, %v524
    %v734 = vadd.f32 %v219, %v637
    %v735 = vadd.f32 %v220, %v414
    %v736 = vadd.f32 %v221, %v527
    %v737 = vadd.f32 %v222, %v640
    %v738 = vadd.f32 %v223, %v417
    %v739 = vadd.f32 %v224, %v530
    %v740 = vadd.f32 %v225, %v643
    %v741 = vadd.f32 %v226, %v420
    %v742 = vadd.f32 %v227, %v533
    %v743 = vadd.f32 %v228, %v646
    %v744 = vadd.f32 %v229, %v423
    %v745 = vadd.f32 %v230, %v536
    %v746 = vadd.f32 %v231, %v649
    %v747 = vadd.f32 %v232, %v426
    %v748 = vadd.f32 %v233, %v539
    %v749 = vadd.f32 %v234, %v652
    %v750 = vadd.f32 %v235, %v429
    %v751 = vadd.f32 %v236, %v542
    %v752 = vadd.f32 %v237, %v655
    %v753 = vadd.f32 %v238, %v432
    %v754 = vadd.f32 %v239, %v545
    %v755 = vadd.f32 %v240, %v658
    %v756 = vadd.f32 %v241, %v435
    %v757 = vadd.f32 %v242, %v548
    %v758 = vadd.f32 %v243, %v661
    %v759 = vadd.f32 %v244, %v438
    %v760 = vadd.f32 %v245, %v551
    %v761 = vadd.f32 %v246, %v664
    %v762 = vadd.f32 %v247, %v441
    %v763 = vadd.f32 %v248, %v554
    %v764 = vadd.f32 %v249, %v667
    %v765 = vadd.f32 %v250, %v444
    %v766 = vadd.f32 %v251, %v557
    %v767 = vadd.f32 %v252, %v670
    %v768 = vadd.f32 %v253, %v447
    %v769 = vadd.f32 %v254, %v560
    %v770 = vadd.f32 %v255, %v673
    %771 = vst [vmem:[#allocation2] sm:$0xff] %v675
    %772 = vst [vmem:[#allocation2 + $0x8] sm:$0xff] %v676
    %773 = vst [vmem:[#allocation2 + $0x10] sm:$0xff] %v677
    %774 = vst [vmem:[#allocation2 + $0x18] sm:$0xff] %v678
    %775 = vst [vmem:[#allocation2 + $0x20] sm:$0xff] %v679
    %776 = vst [vmem:[#allocation2 + $0x28] sm:$0xff] %v680
    %777 = vst [vmem:[#allocation2 + $0x30] sm:$0xff] %v681
    %778 = vst [vmem:[#allocation2 + $0x38] sm:$0xff] %v682
    %779 = vst [vmem:[#allocation2 + $0x40] sm:$0xff] %v683
    %780 = vst [vmem:[#allocation2 + $0x48] sm:$0xff] %v684
    %781 = vst [vmem:[#allocation2 + $0x50] sm:$0xff] %v685
    %782 = vst [vmem:[#allocation2 + $0x58] sm:$0xff] %v686
    %783 = vst [vmem:[#allocation2 + $0x60] sm:$0xff] %v687
    %784 = vst [vmem:[#allocation2 + $0x68] sm:$0xff] %v688
    %785 = vst [vmem:[#allocation2 + $0x70] sm:$0xff] %v689
    %786 = vst [vmem:[#allocation2 + $0x78] sm:$0xff] %v690
    %787 = vst [vmem:[#allocation2 + $0x80] sm:$0xff] %v691
    %788 = vst [vmem:[#allocation2 + $0x88] sm:$0xff] %v692
    %789 = vst [vmem:[#allocation2 + $0x90] sm:$0xff] %v693
    %790 = vst [vmem:[#allocation2 + $0x98] sm:$0xff] %v694
    %791 = vst [vmem:[#allocation2 + $0xa0] sm:$0xff] %v695
    %792 = vst [vmem:[#allocation2 + $0xa8] sm:$0xff] %v696
    %793 = vst [vmem:[#allocation2 + $0xb0] sm:$0xff] %v697
    %794 = vst [vmem:[#allocation2 + $0xb8] sm:$0xff] %v698
    %795 = vst [vmem:[#allocation2 + $0xc0] sm:$0xff] %v699
    %796 = vst [vmem:[#allocation2 + $0xc8] sm:$0xff] %v700
    %797 = vst [vmem:[#allocation2 + $0xd0] sm:$0xff] %v701
    %798 = vst [vmem:[#allocation2 + $0xd8] sm:$0xff] %v702
    %799 = vst [vmem:[#allocation2 + $0xe0] sm:$0xff] %v703
    %800 = vst [vmem:[#allocation2 + $0xe8] sm:$0xff] %v704
    %801 = vst [vmem:[#allocation2 + $0xf0] sm:$0xff] %v705
    %802 = vst [vmem:[#allocation2 + $0xf8] sm:$0xff] %v706
    %803 = vst [vmem:[#allocation2 + $0x100] sm:$0xff] %v707
    %804 = vst [vmem:[#allocation2 + $0x108] sm:$0xff] %v708
    %805 = vst [vmem:[#allocation2 + $0x110] sm:$0xff] %v709
    %806 = vst [vmem:[#allocation2 + $0x118] sm:$0xff] %v710
    %807 = vst [vmem:[#allocation2 + $0x120] sm:$0xff] %v711
    %808 = vst [vmem:[#allocation2 + $0x128] sm:$0xff] %v712
    %809 = vst [vmem:[#allocation2 + $0x130] sm:$0xff] %v713
    %810 = vst [vmem:[#allocation2 + $0x138] sm:$0xff] %v714
    %811 = vst [vmem:[#allocation2 + $0x140] sm:$0xff] %v715
    %812 = vst [vmem:[#allocation2 + $0x148] sm:$0xff] %v716
    %813 = vst [vmem:[#allocation2 + $0x150] sm:$0xff] %v717
    %814 = vst [vmem:[#allocation2 + $0x158] sm:$0xff] %v718
    %815 = vst [vmem:[#allocation2 + $0x160] sm:$0xff] %v719
    %816 = vst [vmem:[#allocation2 + $0x168] sm:$0xff] %v720
    %817 = vst [vmem:[#allocation2 + $0x170] sm:$0xff] %v721
    %818 = vst [vmem:[#allocation2 + $0x178] sm:$0xff] %v722
    %819 = vst [vmem:[#allocation2 + $0x180] sm:$0xff] %v723
    %820 = vst [vmem:[#allocation2 + $0x188] sm:$0xff] %v724
    %821 = vst [vmem:[#allocation2 + $0x190] sm:$0xff] %v725
    %822 = vst [vmem:[#allocation2 + $0x198] sm:$0xff] %v726
    %823 = vst [vmem:[#allocation2 + $0x1a0] sm:$0xff] %v727
    %824 = vst [vmem:[#allocation2 + $0x1a8] sm:$0xff] %v728
    %825 = vst [vmem:[#allocation2 + $0x1b0] sm:$0xff] %v729
    %826 = vst [vmem:[#allocation2 + $0x1b8] sm:$0xff] %v730
    %827 = vst [vmem:[#allocation2 + $0x1c0] sm:$0xff] %v731
    %828 = vst [vmem:[#allocation2 + $0x1c8] sm:$0xff] %v732
    %829 = vst [vmem:[#allocation2 + $0x1d0] sm:$0xff] %v733
    %830 = vst [vmem:[#allocation2 + $0x1d8] sm:$0xff] %v734
    %831 = vst [vmem:[#allocation2 + $0x1e0] sm:$0xff] %v735
    %832 = vst [vmem:[#allocation2 + $0x1e8] sm:$0xff] %v736
    %833 = vst [vmem:[#allocation2 + $0x1f0] sm:$0xff] %v737
    %834 = vst [vmem:[#allocation2 + $0x1f8] sm:$0xff] %v738
    %835 = vst [vmem:[#allocation2 + $0x200] sm:$0xff] %v739
    %836 = vst [vmem:[#allocation2 + $0x208] sm:$0xff] %v740
    %837 = vst [vmem:[#allocation2 + $0x210] sm:$0xff] %v741
    %838 = vst [vmem:[#allocation2 + $0x218] sm:$0xff] %v742
    %839 = vst [vmem:[#allocation2 + $0x220] sm:$0xff] %v743
    %840 = vst [vmem:[#allocation2 + $0x228] sm:$0xff] %v744
    %841 = vst [vmem:[#allocation2 + $0x230] sm:$0xff] %v745
    %842 = vst [vmem:[#allocation2 + $0x238] sm:$0xff] %v746
    %843 = vst [vmem:[#allocation2 + $0x240] sm:$0xff] %v747
    %844 = vst [vmem:[#allocation2 + $0x248] sm:$0xff] %v748
    %845 = vst [vmem:[#allocation2 + $0x250] sm:$0xff] %v749
    %846 = vst [vmem:[#allocation2 + $0x258] sm:$0xff] %v750
    %847 = vst [vmem:[#allocation2 + $0x260] sm:$0xff] %v751
    %848 = vst [vmem:[#allocation2 + $0x268] sm:$0xff] %v752
    %849 = vst [vmem:[#allocation2 + $0x270] sm:$0xff] %v753
    %850 = vst [vmem:[#allocation2 + $0x278] sm:$0xff] %v754
    %851 = vst [vmem:[#allocation2 + $0x280] sm:$0xff] %v755
    %852 = vst [vmem:[#allocation2 + $0x288] sm:$0xff] %v756
    %853 = vst [vmem:[#allocation2 + $0x290] sm:$0xff] %v757
    %854 = vst [vmem:[#allocation2 + $0x298] sm:$0xff] %v758
    %855 = vst [vmem:[#allocation2 + $0x2a0] sm:$0xff] %v759
    %856 = vst [vmem:[#allocation2 + $0x2a8] sm:$0xff] %v760
    %857 = vst [vmem:[#allocation2 + $0x2b0] sm:$0xff] %v761
    %858 = vst [vmem:[#allocation2 + $0x2b8] sm:$0xff] %v762
    %859 = vst [vmem:[#allocation2 + $0x2c0] sm:$0xff] %v763
    %860 = vst [vmem:[#allocation2 + $0x2c8] sm:$0xff] %v764
    %861 = vst [vmem:[#allocation2 + $0x2d0] sm:$0xff] %v765
    %862 = vst [vmem:[#allocation2 + $0x2d8] sm:$0xff] %v766
    %863 = vst [vmem:[#allocation2 + $0x2e0] sm:$0xff] %v767
    %864 = vst [vmem:[#allocation2 + $0x2e8] sm:$0xff] %v768
    %865 = vst [vmem:[#allocation2 + $0x2f0] sm:$0xff] %v769
    %866 = vst [vmem:[#allocation2 + $0x2f8] sm:$0xff] %v770
    // Predicated region
    $region30: #{tpu_custom_call.1} parent=1 // pred_check
      %p867 = pneg %p60
    $region31: #{tpu_custom_call.1} parent=1 // pred_check_branch
      %869 = sbr.rel (%p867) target = $region33
    $region32: #{tpu_custom_call.1} parent=1 // pred_region
      %v870 = vld [vmem:[#allocation2] sm:$0xff]
      %v871 = vld [vmem:[#allocation2 + $0x8] sm:$0xff]
      %v872 = vld [vmem:[#allocation2 + $0x10] sm:$0xff]
      %v873 = vld [vmem:[#allocation2 + $0x18] sm:$0xff]
      %v874 = vld [vmem:[#allocation2 + $0x20] sm:$0xff]
      %v875 = vld [vmem:[#allocation2 + $0x28] sm:$0xff]
      %v876 = vld [vmem:[#allocation2 + $0x30] sm:$0xff]
      %v877 = vld [vmem:[#allocation2 + $0x38] sm:$0xff]
      %v878 = vld [vmem:[#allocation2 + $0x40] sm:$0xff]
      %v879 = vld [vmem:[#allocation2 + $0x48] sm:$0xff]
      %v880 = vld [vmem:[#allocation2 + $0x50] sm:$0xff]
      %v881 = vld [vmem:[#allocation2 + $0x58] sm:$0xff]
      %v882 = vld [vmem:[#allocation2 + $0x60] sm:$0xff]
      %v883 = vld [vmem:[#allocation2 + $0x68] sm:$0xff]
      %v884 = vld [vmem:[#allocation2 + $0x70] sm:$0xff]
      %v885 = vld [vmem:[#allocation2 + $0x78] sm:$0xff]
      %v886 = vld [vmem:[#allocation2 + $0x80] sm:$0xff]
      %v887 = vld [vmem:[#allocation2 + $0x88] sm:$0xff]
      %v888 = vld [vmem:[#allocation2 + $0x90] sm:$0xff]
      %v889 = vld [vmem:[#allocation2 + $0x98] sm:$0xff]
      %v890 = vld [vmem:[#allocation2 + $0xa0] sm:$0xff]
      %v891 = vld [vmem:[#allocation2 + $0xa8] sm:$0xff]
      %v892 = vld [vmem:[#allocation2 + $0xb0] sm:$0xff]
      %v893 = vld [vmem:[#allocation2 + $0xb8] sm:$0xff]
      %v894 = vld [vmem:[#allocation2 + $0xc0] sm:$0xff]
      %v895 = vld [vmem:[#allocation2 + $0xc8] sm:$0xff]
      %v896 = vld [vmem:[#allocation2 + $0xd0] sm:$0xff]
      %v897 = vld [vmem:[#allocation2 + $0xd8] sm:$0xff]
      %v898 = vld [vmem:[#allocation2 + $0xe0] sm:$0xff]
      %v899 = vld [vmem:[#allocation2 + $0xe8] sm:$0xff]
      %v900 = vld [vmem:[#allocation2 + $0xf0] sm:$0xff]
      %v901 = vld [vmem:[#allocation2 + $0xf8] sm:$0xff]
      %v902 = vld [vmem:[#allocation2 + $0x100] sm:$0xff]
      %v903 = vld [vmem:[#allocation2 + $0x108] sm:$0xff]
      %v904 = vld [vmem:[#allocation2 + $0x110] sm:$0xff]
      %v905 = vld [vmem:[#allocation2 + $0x118] sm:$0xff]
      %v906 = vld [vmem:[#allocation2 + $0x120] sm:$0xff]
      %v907 = vld [vmem:[#allocation2 + $0x128] sm:$0xff]
      %v908 = vld [vmem:[#allocation2 + $0x130] sm:$0xff]
      %v909 = vld [vmem:[#allocation2 + $0x138] sm:$0xff]
      %v910 = vld [vmem:[#allocation2 + $0x140] sm:$0xff]
      %v911 = vld [vmem:[#allocation2 + $0x148] sm:$0xff]
      %v912 = vld [vmem:[#allocation2 + $0x150] sm:$0xff]
      %v913 = vld [vmem:[#allocation2 + $0x158] sm:$0xff]
      %v914 = vld [vmem:[#allocation2 + $0x160] sm:$0xff]
      %v915 = vld [vmem:[#allocation2 + $0x168] sm:$0xff]
      %v916 = vld [vmem:[#allocation2 + $0x170] sm:$0xff]
      %v917 = vld [vmem:[#allocation2 + $0x178] sm:$0xff]
      %v918 = vld [vmem:[#allocation2 + $0x180] sm:$0xff]
      %v919 = vld [vmem:[#allocation2 + $0x188] sm:$0xff]
      %v920 = vld [vmem:[#allocation2 + $0x190] sm:$0xff]
      %v921 = vld [vmem:[#allocation2 + $0x198] sm:$0xff]
      %v922 = vld [vmem:[#allocation2 + $0x1a0] sm:$0xff]
      %v923 = vld [vmem:[#allocation2 + $0x1a8] sm:$0xff]
      %v924 = vld [vmem:[#allocation2 + $0x1b0] sm:$0xff]
      %v925 = vld [vmem:[#allocation2 + $0x1b8] sm:$0xff]
      %v926 = vld [vmem:[#allocation2 + $0x1c0] sm:$0xff]
      %v927 = vld [vmem:[#allocation2 + $0x1c8] sm:$0xff]
      %v928 = vld [vmem:[#allocation2 + $0x1d0] sm:$0xff]
      %v929 = vld [vmem:[#allocation2 + $0x1d8] sm:$0xff]
      %v930 = vld [vmem:[#allocation2 + $0x1e0] sm:$0xff]
      %v931 = vld [vmem:[#allocation2 + $0x1e8] sm:$0xff]
      %v932 = vld [vmem:[#allocation2 + $0x1f0] sm:$0xff]
      %v933 = vld [vmem:[#allocation2 + $0x1f8] sm:$0xff]
      %v934 = vld [vmem:[#allocation2 + $0x200] sm:$0xff]
      %v935 = vld [vmem:[#allocation2 + $0x208] sm:$0xff]
      %v936 = vld [vmem:[#allocation2 + $0x210] sm:$0xff]
      %v937 = vld [vmem:[#allocation2 + $0x218] sm:$0xff]
      %v938 = vld [vmem:[#allocation2 + $0x220] sm:$0xff]
      %v939 = vld [vmem:[#allocation2 + $0x228] sm:$0xff]
      %v940 = vld [vmem:[#allocation2 + $0x230] sm:$0xff]
      %v941 = vld [vmem:[#allocation2 + $0x238] sm:$0xff]
      %v942 = vld [vmem:[#allocation2 + $0x240] sm:$0xff]
      %v943 = vld [vmem:[#allocation2 + $0x248] sm:$0xff]
      %v944 = vld [vmem:[#allocation2 + $0x250] sm:$0xff]
      %v945 = vld [vmem:[#allocation2 + $0x258] sm:$0xff]
      %v946 = vld [vmem:[#allocation2 + $0x260] sm:$0xff]
      %v947 = vld [vmem:[#allocation2 + $0x268] sm:$0xff]
      %v948 = vld [vmem:[#allocation2 + $0x270] sm:$0xff]
      %v949 = vld [vmem:[#allocation2 + $0x278] sm:$0xff]
      %v950 = vld [vmem:[#allocation2 + $0x280] sm:$0xff]
      %v951 = vld [vmem:[#allocation2 + $0x288] sm:$0xff]
      %v952 = vld [vmem:[#allocation2 + $0x290] sm:$0xff]
      %v953 = vld [vmem:[#allocation2 + $0x298] sm:$0xff]
      %v954 = vld [vmem:[#allocation2 + $0x2a0] sm:$0xff]
      %v955 = vld [vmem:[#allocation2 + $0x2a8] sm:$0xff]
      %v956 = vld [vmem:[#allocation2 + $0x2b0] sm:$0xff]
      %v957 = vld [vmem:[#allocation2 + $0x2b8] sm:$0xff]
      %v958 = vld [vmem:[#allocation2 + $0x2c0] sm:$0xff]
      %v959 = vld [vmem:[#allocation2 + $0x2c8] sm:$0xff]
      %v960 = vld [vmem:[#allocation2 + $0x2d0] sm:$0xff]
      %v961 = vld [vmem:[#allocation2 + $0x2d8] sm:$0xff]
      %v962 = vld [vmem:[#allocation2 + $0x2e0] sm:$0xff]
      %v963 = vld [vmem:[#allocation2 + $0x2e8] sm:$0xff]
      %v964 = vld [vmem:[#allocation2 + $0x2f0] sm:$0xff]
      %v965 = vld [vmem:[#allocation2 + $0x2f8] sm:$0xff]
      %v966 = vld [vmem:[#allocation8] sm:$0x7]
      %v968 = vperm.slane %v966, 0
      %v969 = vperm.slane %v966, 1
      %v970 = vperm.slane %v966, 2
      %v974 = vadd.f32 %v870, %v968
      %v975 = vadd.f32 %v871, %v969
      %v976 = vadd.f32 %v872, %v970
      %v977 = vadd.f32 %v873, %v968
      %v978 = vadd.f32 %v874, %v969
      %v979 = vadd.f32 %v875, %v970
      %v980 = vadd.f32 %v876, %v968
      %v981 = vadd.f32 %v877, %v969
      %v982 = vadd.f32 %v878, %v970
      %v983 = vadd.f32 %v879, %v968
      %v984 = vadd.f32 %v880, %v969
      %v985 = vadd.f32 %v881, %v970
      %v986 = vadd.f32 %v882, %v968
      %v987 = vadd.f32 %v883, %v969
      %v988 = vadd.f32 %v884, %v970
      %v989 = vadd.f32 %v885, %v968
      %v990 = vadd.f32 %v886, %v969
      %v991 = vadd.f32 %v887, %v970
      %v992 = vadd.f32 %v888, %v968
      %v993 = vadd.f32 %v889, %v969
      %v994 = vadd.f32 %v890, %v970
      %v995 = vadd.f32 %v891, %v968
      %v996 = vadd.f32 %v892, %v969
      %v997 = vadd.f32 %v893, %v970
      %v998 = vadd.f32 %v894, %v968
      %v999 = vadd.f32 %v895, %v969
      %v1000 = vadd.f32 %v896, %v970
      %v1001 = vadd.f32 %v897, %v968
      %v1002 = vadd.f32 %v898, %v969
      %v1003 = vadd.f32 %v899, %v970
      %v1004 = vadd.f32 %v900, %v968
      %v1005 = vadd.f32 %v901, %v969
      %v1006 = vadd.f32 %v902, %v970
      %v1007 = vadd.f32 %v903, %v968
      %v1008 = vadd.f32 %v904, %v969
      %v1009 = vadd.f32 %v905, %v970
      %v1010 = vadd.f32 %v906, %v968
      %v1011 = vadd.f32 %v907, %v969
      %v1012 = vadd.f32 %v908, %v970
      %v1013 = vadd.f32 %v909, %v968
      %v1014 = vadd.f32 %v910, %v969
      %v1015 = vadd.f32 %v911, %v970
      %v1016 = vadd.f32 %v912, %v968
      %v1017 = vadd.f32 %v913, %v969
      %v1018 = vadd.f32 %v914, %v970
      %v1019 = vadd.f32 %v915, %v968
      %v1020 = vadd.f32 %v916, %v969
      %v1021 = vadd.f32 %v917, %v970
      %v1022 = vadd.f32 %v918, %v968
      %v1023 = vadd.f32 %v919, %v969
      %v1024 = vadd.f32 %v920, %v970
      %v1025 = vadd.f32 %v921, %v968
      %v1026 = vadd.f32 %v922, %v969
      %v1027 = vadd.f32 %v923, %v970
      %v1028 = vadd.f32 %v924, %v968
      %v1029 = vadd.f32 %v925, %v969
      %v1030 = vadd.f32 %v926, %v970
      %v1031 = vadd.f32 %v927, %v968
      %v1032 = vadd.f32 %v928, %v969
      %v1033 = vadd.f32 %v929, %v970
      %v1034 = vadd.f32 %v930, %v968
      %v1035 = vadd.f32 %v931, %v969
      %v1036 = vadd.f32 %v932, %v970
      %v1037 = vadd.f32 %v933, %v968
      %v1038 = vadd.f32 %v934, %v969
      %v1039 = vadd.f32 %v935, %v970
      %v1040 = vadd.f32 %v936, %v968
      %v1041 = vadd.f32 %v937, %v969
      %v1042 = vadd.f32 %v938, %v970
      %v1043 = vadd.f32 %v939, %v968
      %v1044 = vadd.f32 %v940, %v969
      %v1045 = vadd.f32 %v941, %v970
      %v1046 = vadd.f32 %v942, %v968
      %v1047 = vadd.f32 %v943, %v969
      %v1048 = vadd.f32 %v944, %v970
      %v1049 = vadd.f32 %v945, %v968
      %v1050 = vadd.f32 %v946, %v969
      %v1051 = vadd.f32 %v947, %v970
      %v1052 = vadd.f32 %v948, %v968
      %v1053 = vadd.f32 %v949, %v969
      %v1054 = vadd.f32 %v950, %v970
      %v1055 = vadd.f32 %v951, %v968
      %v1056 = vadd.f32 %v952, %v969
      %v1057 = vadd.f32 %v953, %v970
      %v1058 = vadd.f32 %v954, %v968
      %v1059 = vadd.f32 %v955, %v969
      %v1060 = vadd.f32 %v956, %v970
      %v1061 = vadd.f32 %v957, %v968
      %v1062 = vadd.f32 %v958, %v969
      %v1063 = vadd.f32 %v959, %v970
      %v1064 = vadd.f32 %v960, %v968
      %v1065 = vadd.f32 %v961, %v969
      %v1066 = vadd.f32 %v962, %v970
      %v1067 = vadd.f32 %v963, %v968
      %v1068 = vadd.f32 %v964, %v969
      %v1069 = vadd.f32 %v965, %v970
      %1070 = vst [vmem:[#allocation9] sm:$0xff] %v974
      %1071 = vst [vmem:[#allocation9 + $0x8] sm:$0xff] %v975
      %1072 = vst [vmem:[#allocation9 + $0x10] sm:$0xff] %v976
      %1073 = vst [vmem:[#allocation9 + $0x18] sm:$0xff] %v977
      %1074 = vst [vmem:[#allocation9 + $0x20] sm:$0xff] %v978
      %1075 = vst [vmem:[#allocation9 + $0x28] sm:$0xff] %v979
      %1076 = vst [vmem:[#allocation9 + $0x30] sm:$0xff] %v980
      %1077 = vst [vmem:[#allocation9 + $0x38] sm:$0xff] %v981
      %1078 = vst [vmem:[#allocation9 + $0x40] sm:$0xff] %v982
      %1079 = vst [vmem:[#allocation9 + $0x48] sm:$0xff] %v983
      %1080 = vst [vmem:[#allocation9 + $0x50] sm:$0xff] %v984
      %1081 = vst [vmem:[#allocation9 + $0x58] sm:$0xff] %v985
      %1082 = vst [vmem:[#allocation9 + $0x60] sm:$0xff] %v986
      %1083 = vst [vmem:[#allocation9 + $0x68] sm:$0xff] %v987
      %1084 = vst [vmem:[#allocation9 + $0x70] sm:$0xff] %v988
      %1085 = vst [vmem:[#allocation9 + $0x78] sm:$0xff] %v989
      %1086 = vst [vmem:[#allocation9 + $0x80] sm:$0xff] %v990
      %1087 = vst [vmem:[#allocation9 + $0x88] sm:$0xff] %v991
      %1088 = vst [vmem:[#allocation9 + $0x90] sm:$0xff] %v992
      %1089 = vst [vmem:[#allocation9 + $0x98] sm:$0xff] %v993
      %1090 = vst [vmem:[#allocation9 + $0xa0] sm:$0xff] %v994
      %1091 = vst [vmem:[#allocation9 + $0xa8] sm:$0xff] %v995
      %1092 = vst [vmem:[#allocation9 + $0xb0] sm:$0xff] %v996
      %1093 = vst [vmem:[#allocation9 + $0xb8] sm:$0xff] %v997
      %1094 = vst [vmem:[#allocation9 + $0xc0] sm:$0xff] %v998
      %1095 = vst [vmem:[#allocation9 + $0xc8] sm:$0xff] %v999
      %1096 = vst [vmem:[#allocation9 + $0xd0] sm:$0xff] %v1000
      %1097 = vst [vmem:[#allocation9 + $0xd8] sm:$0xff] %v1001
      %1098 = vst [vmem:[#allocation9 + $0xe0] sm:$0xff] %v1002
      %1099 = vst [vmem:[#allocation9 + $0xe8] sm:$0xff] %v1003
      %1100 = vst [vmem:[#allocation9 + $0xf0] sm:$0xff] %v1004
      %1101 = vst [vmem:[#allocation9 + $0xf8] sm:$0xff] %v1005
      %1102 = vst [vmem:[#allocation9 + $0x100] sm:$0xff] %v1006
      %1103 = vst [vmem:[#allocation9 + $0x108] sm:$0xff] %v1007
      %1104 = vst [vmem:[#allocation9 + $0x110] sm:$0xff] %v1008
      %1105 = vst [vmem:[#allocation9 + $0x118] sm:$0xff] %v1009
      %1106 = vst [vmem:[#allocation9 + $0x120] sm:$0xff] %v1010
      %1107 = vst [vmem:[#allocation9 + $0x128] sm:$0xff] %v1011
      %1108 = vst [vmem:[#allocation9 + $0x130] sm:$0xff] %v1012
      %1109 = vst [vmem:[#allocation9 + $0x138] sm:$0xff] %v1013
      %1110 = vst [vmem:[#allocation9 + $0x140] sm:$0xff] %v1014
      %1111 = vst [vmem:[#allocation9 + $0x148] sm:$0xff] %v1015
      %1112 = vst [vmem:[#allocation9 + $0x150] sm:$0xff] %v1016
      %1113 = vst [vmem:[#allocation9 + $0x158] sm:$0xff] %v1017
      %1114 = vst [vmem:[#allocation9 + $0x160] sm:$0xff] %v1018
      %1115 = vst [vmem:[#allocation9 + $0x168] sm:$0xff] %v1019
      %1116 = vst [vmem:[#allocation9 + $0x170] sm:$0xff] %v1020
      %1117 = vst [vmem:[#allocation9 + $0x178] sm:$0xff] %v1021
      %1118 = vst [vmem:[#allocation9 + $0x180] sm:$0xff] %v1022
      %1119 = vst [vmem:[#allocation9 + $0x188] sm:$0xff] %v1023
      %1120 = vst [vmem:[#allocation9 + $0x190] sm:$0xff] %v1024
      %1121 = vst [vmem:[#allocation9 + $0x198] sm:$0xff] %v1025
      %1122 = vst [vmem:[#allocation9 + $0x1a0] sm:$0xff] %v1026
      %1123 = vst [vmem:[#allocation9 + $0x1a8] sm:$0xff] %v1027
      %1124 = vst [vmem:[#allocation9 + $0x1b0] sm:$0xff] %v1028
      %1125 = vst [vmem:[#allocation9 + $0x1b8] sm:$0xff] %v1029
      %1126 = vst [vmem:[#allocation9 + $0x1c0] sm:$0xff] %v1030
      %1127 = vst [vmem:[#allocation9 + $0x1c8] sm:$0xff] %v1031
      %1128 = vst [vmem:[#allocation9 + $0x1d0] sm:$0xff] %v1032
      %1129 = vst [vmem:[#allocation9 + $0x1d8] sm:$0xff] %v1033
      %1130 = vst [vmem:[#allocation9 + $0x1e0] sm:$0xff] %v1034
      %1131 = vst [vmem:[#allocation9 + $0x1e8] sm:$0xff] %v1035
      %1132 = vst [vmem:[#allocation9 + $0x1f0] sm:$0xff] %v1036
      %1133 = vst [vmem:[#allocation9 + $0x1f8] sm:$0xff] %v1037
      %1134 = vst [vmem:[#allocation9 + $0x200] sm:$0xff] %v1038
      %1135 = vst [vmem:[#allocation9 + $0x208] sm:$0xff] %v1039
      %1136 = vst [vmem:[#allocation9 + $0x210] sm:$0xff] %v1040
      %1137 = vst [vmem:[#allocation9 + $0x218] sm:$0xff] %v1041
      %1138 = vst [vmem:[#allocation9 + $0x220] sm:$0xff] %v1042
      %1139 = vst [vmem:[#allocation9 + $0x228] sm:$0xff] %v1043
      %1140 = vst [vmem:[#allocation9 + $0x230] sm:$0xff] %v1044
      %1141 = vst [vmem:[#allocation9 + $0x238] sm:$0xff] %v1045
      %1142 = vst [vmem:[#allocation9 + $0x240] sm:$0xff] %v1046
      %1143 = vst [vmem:[#allocation9 + $0x248] sm:$0xff] %v1047
      %1144 = vst [vmem:[#allocation9 + $0x250] sm:$0xff] %v1048
      %1145 = vst [vmem:[#allocation9 + $0x258] sm:$0xff] %v1049
      %1146 = vst [vmem:[#allocation9 + $0x260] sm:$0xff] %v1050
      %1147 = vst [vmem:[#allocation9 + $0x268] sm:$0xff] %v1051
      %1148 = vst [vmem:[#allocation9 + $0x270] sm:$0xff] %v1052
      %1149 = vst [vmem:[#allocation9 + $0x278] sm:$0xff] %v1053
      %1150 = vst [vmem:[#allocation9 + $0x280] sm:$0xff] %v1054
      %1151 = vst [vmem:[#allocation9 + $0x288] sm:$0xff] %v1055
      %1152 = vst [vmem:[#allocation9 + $0x290] sm:$0xff] %v1056
      %1153 = vst [vmem:[#allocation9 + $0x298] sm:$0xff] %v1057
      %1154 = vst [vmem:[#allocation9 + $0x2a0] sm:$0xff] %v1058
      %1155 = vst [vmem:[#allocation9 + $0x2a8] sm:$0xff] %v1059
      %1156 = vst [vmem:[#allocation9 + $0x2b0] sm:$0xff] %v1060
      %1157 = vst [vmem:[#allocation9 + $0x2b8] sm:$0xff] %v1061
      %1158 = vst [vmem:[#allocation9 + $0x2c0] sm:$0xff] %v1062
      %1159 = vst [vmem:[#allocation9 + $0x2c8] sm:$0xff] %v1063
      %1160 = vst [vmem:[#allocation9 + $0x2d0] sm:$0xff] %v1064
      %1161 = vst [vmem:[#allocation9 + $0x2d8] sm:$0xff] %v1065
      %1162 = vst [vmem:[#allocation9 + $0x2e0] sm:$0xff] %v1066
      %1163 = vst [vmem:[#allocation9 + $0x2e8] sm:$0xff] %v1067
      %1164 = vst [vmem:[#allocation9 + $0x2f0] sm:$0xff] %v1068
      %1165 = vst [vmem:[#allocation9 + $0x2f8] sm:$0xff] %v1069
    $region33: #{tpu_custom_call.1} parent=1 // pred_fallthru
      _
    // Predicated region
    $region34: #{tpu_custom_call.1} parent=1 // pred_check
      _
    $region35: #{tpu_custom_call.1} parent=1 // pred_check_branch
      %1167 = sbr.rel (0) target = $region37
    $region36: #{tpu_custom_call.1} parent=1 // pred_region
      %1169 = vsyncadd [#allocation5], 0
      %s1170 = sshll.u32 [#allocation9], 4
      %s1171 = int_to_ptr.vmem [resolvable:$true] %s1170
      %s1172 = sshll.u32 %s3, 4
      %s1173 = int_to_ptr.hbm [resolvable:$true] %s1172
      %1178 = dma.vmem_to_hbm [thread:$0]  %s1171, 12288, %s1173, [#allocation5], 384, 384, 24
    $region37: #{tpu_custom_call.1} parent=1 // pred_fallthru
      _
    // Predicated region
    $region38: #{tpu_custom_call.1} parent=1 // pred_check
      _
    $region39: #{tpu_custom_call.1} parent=1 // pred_check_branch
      %1180 = sbr.rel (0) target = $region41
    $region40: #{tpu_custom_call.1} parent=1 // pred_region
      %1182 = dma.done [#allocation5], 12288
    $region41: #{tpu_custom_call.1} parent=1 // pred_fallthru
      _
    %1183 = vsyncpa [#allocation4], 1
    %1184 = vsyncpa [#allocation7], 1
    %1185 = vsyncpa [#allocation5], 1

</llo_original>
